<compile_context>
chip_gen: v6e
topology: v6e:2x2x1
jax: 0.10.0
libtpu: 0.0.40
codegen_flags: <defaults>
</compile_context>

<pallas_src>
import functools

import jax
import jax.numpy as jnp
from jax.experimental import pallas as pl
from jax.experimental.pallas import tpu as pltpu

MATMUL_DTYPE = jnp.bfloat16          # MXU-native operand dtype on v5e/v6e/v7x
ACT_DTYPE = jnp.bfloat16             # dtype of the (T, Bp, Hp) pre-activations in HBM
VMEM_LIMIT_BYTES = 32 * 1024 * 1024  # explicit budget: > v5e 16 MiB default, < v7x 64 MiB physical
TIME_BLOCK = 32                      # timesteps per grid step (amortizes ~600-cycle step overhead)


# ---------------------------------------------------------------------------
# helpers
# ---------------------------------------------------------------------------
def _round_up(n, m):
    return ((n + m - 1) // m) * m


# ---------------------------------------------------------------------------
# Kernel 1: time-parallel input projection  xW = x @ W_ih + (b_ih + b_hh)
#   Operands flattened to 2-D in the wrapper; weights/bias are whole-array VMEM residents.
# ---------------------------------------------------------------------------
def _proj_kernel(x_ref, w_ref, b_ref, out_ref):
    z = jnp.dot(x_ref[...], w_ref[...], preferred_element_type=jnp.float32) + b_ref[...]
    out_ref[...] = z.astype(out_ref.dtype)


def project_seq(x_tm, w_ih, bias, m_blk_cap=512):
    """x_tm: (Tp, Bp, Din) f32 time-major.  Returns (Tp, Bp, Hp) ACT_DTYPE pre-activations."""
    Tp, Bp, Din = x_tm.shape
    Hp = w_ih.shape[1]
    M = Tp * Bp
    # Flatten (time, batch) at HBM level (free) -> lane/sublane-dense 2-D matmul operand.
    x2 = x_tm.reshape(M, Din).astype(MATMUL_DTYPE)
    m_blk = M if M < m_blk_cap else m_blk_cap
    Mp = _round_up(M, m_blk)
    if Mp != M:
        x2 = jnp.pad(x2, ((0, Mp - M), (0, 0)))

    out = pl.pallas_call(
        _proj_kernel,
        out_shape=jax.ShapeDtypeStruct((Mp, Hp), ACT_DTYPE),
        grid_spec=pltpu.PrefetchScalarGridSpec(
            num_scalar_prefetch=0,
            grid=(Mp // m_blk,),
            in_specs=[
                pl.BlockSpec((m_blk, Din), lambda i: (i, 0)),
                pl.BlockSpec(memory_space=pltpu.MemorySpace.VMEM),  # W_ih: single VMEM copy
                pl.BlockSpec(memory_space=pltpu.MemorySpace.VMEM),  # bias
            ],
            out_specs=pl.BlockSpec((m_blk, Hp), lambda i: (i, 0)),
        ),
        compiler_params=pltpu.CompilerParams(
            dimension_semantics=("parallel",),
            vmem_limit_bytes=VMEM_LIMIT_BYTES),
    )(x2, w_ih, bias)
    return out[:M].reshape(Tp, Bp, Hp)


# ---------------------------------------------------------------------------
# Kernel 2: recurrence for an intermediate layer, fused with the NEXT layer's input
# projection.  h carried in f32 VMEM scratch; matmuls in bf16 with f32 accumulation.
# ---------------------------------------------------------------------------
def _rnn_seq_proj_kernel(t_real, tb, need_mask,
                         xw_ref, whh_ref, wnext_ref, bnext_ref,
                         out_ref, h_ref, hblk_ref):
    tblk = pl.program_id(0)

    @pl.when(tblk == 0)
    def _init():
        h_ref[...] = jnp.zeros_like(h_ref)       # h0 = zeros (matches torch.zeros)

    whh = whh_ref[...]                           # bf16 (Hp, Hp), VMEM resident
    t0 = tblk * tb

    def step(i, h):
        z = xw_ref[i].astype(jnp.float32) + jnp.dot(
            h.astype(MATMUL_DTYPE), whh, preferred_element_type=jnp.float32)
        h_new = jnp.tanh(z)
        if need_mask:                            # static: only emitted when T was padded
            h_new = jnp.where(t0 + i < t_real, h_new, h)
        hblk_ref[i] = h_new
        return h_new

    h_ref[...] = jax.lax.fori_loop(0, tb, step, h_ref[...], unroll=True)

    # Next layer's input projection, batched over the time block (off the serial path).
    tb_, bp, hp = hblk_ref.shape
    hblk = hblk_ref[...].reshape(tb_ * bp, hp).astype(MATMUL_DTYPE)
    proj = jnp.dot(hblk, wnext_ref[...], preferred_element_type=jnp.float32) + bnext_ref[...]
    out_ref[...] = proj.reshape(tb_, bp, hp).astype(out_ref.dtype)


def rnn_seq_proj(xw, w_hh, w_ih_next, bias_next, *, t_real, tb):
    """xw: (Tp, Bp, Hp) pre-activations of this layer.  Returns next layer's xW (bf16)."""
    Tp, Bp, Hp = xw.shape
    kernel = functools.partial(_rnn_seq_proj_kernel, t_real, tb, Tp != t_real)
    return pl.pallas_call(
        kernel,
        out_shape=jax.ShapeDtypeStruct((Tp, Bp, Hp), ACT_DTYPE),
        grid_spec=pltpu.PrefetchScalarGridSpec(
            num_scalar_prefetch=0,
            grid=(Tp // tb,),
            in_specs=[
                pl.BlockSpec((tb, Bp, Hp), lambda t: (t, 0, 0)),
                pl.BlockSpec(memory_space=pltpu.MemorySpace.VMEM),  # W_hh
                pl.BlockSpec(memory_space=pltpu.MemorySpace.VMEM),  # W_ih of next layer
                pl.BlockSpec(memory_space=pltpu.MemorySpace.VMEM),  # bias of next layer
            ],
            out_specs=pl.BlockSpec((tb, Bp, Hp), lambda t: (t, 0, 0)),
            scratch_shapes=[
                pltpu.VMEM((Bp, Hp), jnp.float32),       # carried hidden state (f32)
                pltpu.VMEM((tb, Bp, Hp), jnp.float32),   # hidden states of this time block
            ],
        ),
        compiler_params=pltpu.CompilerParams(
            dimension_semantics=("arbitrary",),          # recurrence => sequential axis
            vmem_limit_bytes=VMEM_LIMIT_BYTES),
    )(xw, w_hh, w_ih_next, bias_next)


# ---------------------------------------------------------------------------
# Kernel 3: recurrence for the LAST layer, fused with the fc head on the final grid step.
# ---------------------------------------------------------------------------
def _rnn_last_kernel(t_real, tb, need_mask,
                     xw_ref, whh_ref, fcw_ref, fcb_ref, out_ref, h_ref):
    tblk = pl.program_id(0)

    @pl.when(tblk == 0)
    def _init():
        h_ref[...] = jnp.zeros_like(h_ref)

    whh = whh_ref[...]
    t0 = tblk * tb

    def step(i, h):
        z = xw_ref[i].astype(jnp.float32) + jnp.dot(
            h.astype(MATMUL_DTYPE), whh, preferred_element_type=jnp.float32)
        h_new = jnp.tanh(z)
        if need_mask:
            h_new = jnp.where(t0 + i < t_real, h_new, h)
        return h_new

    h = jax.lax.fori_loop(0, tb, step, h_ref[...], unroll=True)
    h_ref[...] = h

    @pl.when(tblk == pl.num_programs(0) - 1)
    def _finalize():
        out_ref[...] = (jnp.dot(h.astype(MATMUL_DTYPE), fcw_ref[...],
                                preferred_element_type=jnp.float32) + fcb_ref[...])


def rnn_last(xw, w_hh, fc_w, fc_b, *, t_real, tb):
    """xw: (Tp, Bp, Hp).  Returns padded logits (Bp, Cp) in f32."""
    Tp, Bp, Hp = xw.shape
    Cp = fc_w.shape[1]
    kernel = functools.partial(_rnn_last_kernel, t_real, tb, Tp != t_real)
    return pl.pallas_call(
        kernel,
        out_shape=jax.ShapeDtypeStruct((Bp, Cp), jnp.float32),
        grid_spec=pltpu.PrefetchScalarGridSpec(
            num_scalar_prefetch=0,
            grid=(Tp // tb,),
            in_specs=[
                pl.BlockSpec((tb, Bp, Hp), lambda t: (t, 0, 0)),
                pl.BlockSpec(memory_space=pltpu.MemorySpace.VMEM),  # W_hh
                pl.BlockSpec(memory_space=pltpu.MemorySpace.VMEM),  # fc_w
                pl.BlockSpec(memory_space=pltpu.MemorySpace.VMEM),  # fc_b
            ],
            out_specs=pl.BlockSpec((Bp, Cp), lambda t: (0, 0)),     # resident, written last step
            scratch_shapes=[pltpu.VMEM((Bp, Hp), jnp.float32)],
        ),
        compiler_params=pltpu.CompilerParams(
            dimension_semantics=("arbitrary",),
            vmem_limit_bytes=VMEM_LIMIT_BYTES),
    )(xw, w_hh, fc_w, fc_b)


# ---------------------------------------------------------------------------
# Parameter init (deterministic, PyTorch-style U(-1/sqrt(H), 1/sqrt(H))), unpadded f32.
# ---------------------------------------------------------------------------
def init_params(key, input_dim, hidden_dim, n_layers, n_classes):
    params = {"layers": []}
    bound = 1.0 / jnp.sqrt(hidden_dim)
    for l in range(n_layers):
        in_dim = input_dim if l == 0 else hidden_dim
        key, k1, k2, k3, k4 = jax.random.split(key, 5)
        params["layers"].append({
            "w_ih": jax.random.uniform(k1, (in_dim, hidden_dim), jnp.float32, -bound, bound),
            "w_hh": jax.random.uniform(k2, (hidden_dim, hidden_dim), jnp.float32, -bound, bound),
            "b_ih": jax.random.uniform(k3, (1, hidden_dim), jnp.float32, -bound, bound),
            "b_hh": jax.random.uniform(k4, (1, hidden_dim), jnp.float32, -bound, bound),
        })
    key, k1, k2 = jax.random.split(key, 3)
    params["fc_w"] = jax.random.uniform(k1, (hidden_dim, n_classes), jnp.float32, -bound, bound)
    params["fc_b"] = jax.random.uniform(k2, (1, n_classes), jnp.float32, -bound, bound)
    return params


# ---------------------------------------------------------------------------
# Forward: mirrors SimpleRNN.forward.  Pads to (8,128)-aligned shapes, pads T to a multiple
# of the time block (masked in the recurrence), slices the real logits at the end.
# ---------------------------------------------------------------------------
@jax.jit
def simple_rnn_forward(params, x):
    """x: (B, T, D) batch_first f32.  Returns (B, n_classes) f32."""
    B, T, D = x.shape
    H = params["layers"][0]["w_hh"].shape[0]
    C = params["fc_w"].shape[1]
    L = len(params["layers"])

    Bp = _round_up(B, 8)        # sublane tile
    Hp = _round_up(H, 128)      # lane tile
    Cp = _round_up(C, 128)
    tb = min(TIME_BLOCK, T)     # timesteps per grid step
    Tp = _round_up(T, tb)       # padded steps are masked inside the recurrence kernels

    # time-major, zero-pad time and batch
    x_tm = jnp.transpose(x, (1, 0, 2)).astype(jnp.float32)
    x_tm = jnp.pad(x_tm, ((0, Tp - T), (0, Bp - B), (0, 0)))

    # zero-pad weights, cast MXU operands to bf16; fold b_ih + b_hh into one f32 bias
    wih_p, whh_p, bias_p = [], [], []
    for l, lp in enumerate(params["layers"]):
        in_dim = lp["w_ih"].shape[0]
        in_pad = in_dim if l == 0 else Hp
        wih_p.append(jnp.pad(lp["w_ih"], ((0, in_pad - in_dim), (0, Hp - H)))
                     .astype(MATMUL_DTYPE))
        whh_p.append(jnp.pad(lp["w_hh"], ((0, Hp - H), (0, Hp - H))).astype(MATMUL_DTYPE))
        bias_p.append(jnp.pad(lp["b_ih"] + lp["b_hh"], ((0, 0), (0, Hp - H))))  # f32
    fcw_p = jnp.pad(params["fc_w"], ((0, Hp - H), (0, Cp - C))).astype(MATMUL_DTYPE)
    fcb_p = jnp.pad(params["fc_b"], ((0, 0), (0, Cp - C)))                      # f32

    # layer 0 input projection: one big time-parallel matmul
    xw = project_seq(x_tm, wih_p[0], bias_p[0])                     # (Tp, Bp, Hp) bf16

    # layers 0 .. L-2: recurrence + fused projection into the next layer
    for l in range(L - 1):
        xw = rnn_seq_proj(xw, whh_p[l], wih_p[l + 1], bias_p[l + 1], t_real=T, tb=tb)

    # last layer: recurrence + fused fc head
    logits_p = rnn_last(xw, whh_p[L - 1], fcw_p, fcb_p, t_real=T, tb=tb)   # (Bp, Cp) f32
    return logits_p[:B, :C]


# ---------------------------------------------------------------------------
# Pure-JAX reference.  matmul_dtype/act_dtype=f32 reproduces the PyTorch module exactly;
# matmul_dtype/act_dtype=bf16 reproduces the kernel's mixed-precision numerics.
# ---------------------------------------------------------------------------
def reference_forward(params, x, matmul_dtype=jnp.float32, act_dtype=jnp.float32):
    def mm(a, b):
        return jnp.dot(a.astype(matmul_dtype), b.astype(matmul_dtype),
                       preferred_element_type=jnp.float32)

    x_tm = jnp.transpose(x, (1, 0, 2)).astype(jnp.float32)   # (T, B, D)
    B = x.shape[0]
    L = len(params["layers"])

    lp0 = params["layers"][0]
    xw = (mm(x_tm, lp0["w_ih"]) + (lp0["b_ih"] + lp0["b_hh"])[0]).astype(act_dtype)
    h_last = None
    for l in range(L):
        lp = params["layers"][l]
        H = lp["w_hh"].shape[0]

        def step(h, xw_t, w_hh=lp["w_hh"]):
            h_new = jnp.tanh(xw_t.astype(jnp.float32) + mm(h, w_hh))
            return h_new, h_new

        h_last, h_seq = jax.lax.scan(step, jnp.zeros((B, H), jnp.float32), xw)
        if l + 1 < L:
            lpn = params["layers"][l + 1]
            xw = (mm(h_seq, lpn["w_ih"]) + (lpn["b_ih"] + lpn["b_hh"])[0]).astype(act_dtype)
    return mm(h_last, params["fc_w"]) + params["fc_b"][0]


if __name__ == "__main__":
    B, T, D, H, L, C = 2, 8, 16, 32, 2, 4  # batch, seq, input_dim, hidden_dim, n_layers, n_classes

    key = jax.random.PRNGKey(0)
    pkey, xkey = jax.random.split(key)
    params = init_params(pkey, D, H, L, C)
    x = jax.random.normal(xkey, (B, T, D), jnp.float32)

    out = simple_rnn_forward(params, x)
    jax.block_until_ready(out)
    assert out.shape == (B, C)

    # Tight check against a reference using the same bf16 matmul / bf16 activation numerics.
    ref_mixed = reference_forward(params, x, matmul_dtype=MATMUL_DTYPE, act_dtype=ACT_DTYPE)
    assert jnp.allclose(out, ref_mixed, atol=1e-2, rtol=1e-2), "mismatch vs bf16-matched reference"

    # Sanity check against the exact f32 (PyTorch-equivalent) forward (bf16 tolerance).
    ref_f32 = reference_forward(params, x)
    assert jnp.allclose(out, ref_f32, atol=1e-1, rtol=1e-1), "mismatch vs f32 reference"

    print("KERNEL_OK")
</pallas_src>

<mosaic_0001>
module attributes {stable_mosaic.version = 11 : i64} {
  func.func @_proj_kernel(%arg0: i32, %arg1: memref<64x16xbf16, #tpu.memory_space<vmem>>, %arg2: memref<16x128xbf16, #tpu.memory_space<vmem>>, %arg3: memref<1x128xf32, #tpu.memory_space<vmem>>, %arg4: memref<64x128xbf16, #tpu.memory_space<vmem>>) attributes {dimension_semantics = [#tpu.dimension_semantics<parallel>], iteration_bounds = array<i64: 1>, scalar_prefetch = 0 : i64, scratch_operands = 0 : i64, tpu.core_type = #tpu.core_type<tc>, window_params = [{transform_indices = @transform_0, window_bounds = array<i64: 64, 16>}, {pipeline_mode = #tpu.pipeline_mode<synchronous>, transform_indices = @transform_1, window_bounds = array<i64: 16, 128>}, {pipeline_mode = #tpu.pipeline_mode<synchronous>, transform_indices = @transform_2, window_bounds = array<i64: 1, 128>}, {transform_indices = @transform_3, window_bounds = array<i64: 64, 128>}]} {
    %c0 = arith.constant 0 : index
    %c0_0 = arith.constant 0 : index
    %0 = vector.load %arg1[%c0, %c0_0] : memref<64x16xbf16, #tpu.memory_space<vmem>>, vector<64x16xbf16>
    %c0_1 = arith.constant 0 : index
    %c0_2 = arith.constant 0 : index
    %1 = vector.load %arg2[%c0_1, %c0_2] : memref<16x128xbf16, #tpu.memory_space<vmem>>, vector<16x128xbf16>
    %cst = arith.constant dense<0.000000e+00> : vector<64x128xf32>
    %2 = tpu.matmul %0, %1, %cst {dimension_numbers = #tpu.dot_dimension_numbers<[1], [0], [0], [1], [0, 0, 1, 1], [], []>} : vector<64x16xbf16>, vector<16x128xbf16>, vector<64x128xf32> -> vector<64x128xf32>
    %c0_3 = arith.constant 0 : index
    %c0_4 = arith.constant 0 : index
    %3 = vector.load %arg3[%c0_3, %c0_4] : memref<1x128xf32, #tpu.memory_space<vmem>>, vector<1x128xf32>
    %4 = vector.broadcast %3 : vector<1x128xf32> to vector<64x128xf32>
    %5 = arith.addf %2, %4 : vector<64x128xf32>
    %6 = arith.truncf %5 : vector<64x128xf32> to vector<64x128xbf16>
    %c0_5 = arith.constant 0 : index
    %c0_6 = arith.constant 0 : index
    %7 = vector.load %arg4[%c0_5, %c0_6] : memref<64x128xbf16, #tpu.memory_space<vmem>>, vector<64x128xbf16>
    tpu.vector_store %arg4[%c0_5, %c0_6], %6 {strides = array<i32>} : memref<64x128xbf16, #tpu.memory_space<vmem>>, vector<64x128xbf16>,
    return
  }
  func.func @transform_0(%arg0: i32) -> (i32, i32) {
    %c0_i32 = arith.constant 0 : i32
    %c0_i32_0 = arith.constant 0 : i32
    return %arg0, %c0_i32 : i32, i32
  }
  func.func @transform_1(%arg0: i32) -> (i32, i32) {
    %c0_i32 = arith.constant 0 : i32
    %c0_i32_0 = arith.constant 0 : i32
    %c0_i32_1 = arith.constant 0 : i32
    return %c0_i32, %c0_i32_0 : i32, i32
  }
  func.func @transform_2(%arg0: i32) -> (i32, i32) {
    %c0_i32 = arith.constant 0 : i32
    %c0_i32_0 = arith.constant 0 : i32
    %c0_i32_1 = arith.constant 0 : i32
    return %c0_i32, %c0_i32_0 : i32, i32
  }
  func.func @transform_3(%arg0: i32) -> (i32, i32) {
    %c0_i32 = arith.constant 0 : i32
    %c0_i32_0 = arith.constant 0 : i32
    return %arg0, %c0_i32 : i32, i32
  }
}

module attributes {stable_mosaic.version = 11 : i64} {
  func.func @_rnn_seq_proj_kernel(%arg0: i32, %arg1: memref<8x8x128xbf16, #tpu.memory_space<vmem>>, %arg2: memref<128x128xbf16, #tpu.memory_space<vmem>>, %arg3: memref<128x128xbf16, #tpu.memory_space<vmem>>, %arg4: memref<1x128xf32, #tpu.memory_space<vmem>>, %arg5: memref<8x8x128xbf16, #tpu.memory_space<vmem>>, %arg6: memref<8x128xf32, #tpu.memory_space<vmem>>, %arg7: memref<8x8x128xf32, #tpu.memory_space<vmem>>) attributes {dimension_semantics = [#tpu.dimension_semantics<arbitrary>], iteration_bounds = array<i64: 1>, scalar_prefetch = 0 : i64, scratch_operands = 2 : i64, tpu.core_type = #tpu.core_type<tc>, window_params = [{transform_indices = @transform_0, window_bounds = array<i64: 8, 8, 128>}, {pipeline_mode = #tpu.pipeline_mode<synchronous>, transform_indices = @transform_1, window_bounds = array<i64: 128, 128>}, {pipeline_mode = #tpu.pipeline_mode<synchronous>, transform_indices = @transform_2, window_bounds = array<i64: 128, 128>}, {pipeline_mode = #tpu.pipeline_mode<synchronous>, transform_indices = @transform_3, window_bounds = array<i64: 1, 128>}, {transform_indices = @transform_4, window_bounds = array<i64: 8, 8, 128>}]} {
    %c0_i32 = arith.constant 0 : i32
    %0 = arith.cmpi eq, %arg0, %c0_i32 : i32
    %1 = arith.extui %0 : i1 to i32
    %c0_i32_0 = arith.constant 0 : i32
    %2 = arith.cmpi ne, %1, %c0_i32_0 : i32
    scf.if %2 {
      %cst_57 = arith.constant 0.000000e+00 : f32
      %113 = vector.broadcast %cst_57 : f32 to vector<8x128xf32>
      %c0_58 = arith.constant 0 : index
      %c0_59 = arith.constant 0 : index
      %114 = vector.load %arg6[%c0_58, %c0_59] : memref<8x128xf32, #tpu.memory_space<vmem>>, vector<8x128xf32>
      tpu.vector_store %arg6[%c0_58, %c0_59], %113 {strides = array<i32>} : memref<8x128xf32, #tpu.memory_space<vmem>>, vector<8x128xf32>,
    } else {
    }
    %c0 = arith.constant 0 : index
    %c0_1 = arith.constant 0 : index
    %3 = vector.load %arg2[%c0, %c0_1] : memref<128x128xbf16, #tpu.memory_space<vmem>>, vector<128x128xbf16>
    %c0_2 = arith.constant 0 : index
    %c0_3 = arith.constant 0 : index
    %4 = vector.load %arg6[%c0_2, %c0_3] : memref<8x128xf32, #tpu.memory_space<vmem>>, vector<8x128xf32>
    %c0_i32_4 = arith.constant 0 : i32
    %5 = arith.index_cast %c0_i32_4 : i32 to index
    %c0_5 = arith.constant 0 : index
    %c0_6 = arith.constant 0 : index
    %6 = vector.load %arg1[%5, %c0_5, %c0_6] : memref<8x8x128xbf16, #tpu.memory_space<vmem>>, vector<1x8x128xbf16>
    %7 = vector.shape_cast %6 : vector<1x8x128xbf16> to vector<8x128xbf16>
    %8 = arith.extf %7 : vector<8x128xbf16> to vector<8x128xf32>
    %9 = arith.truncf %4 : vector<8x128xf32> to vector<8x128xbf16>
    %cst = arith.constant dense<0.000000e+00> : vector<8x128xf32>
    %10 = tpu.matmul %9, %3, %cst {dimension_numbers = #tpu.dot_dimension_numbers<[1], [0], [0], [1], [0, 0, 1, 1], [], []>} : vector<8x128xbf16>, vector<128x128xbf16>, vector<8x128xf32> -> vector<8x128xf32>
    %11 = arith.addf %8, %10 : vector<8x128xf32>
    %12 = math.tanh %11 : vector<8x128xf32>
    %13 = arith.index_cast %c0_i32_4 : i32 to index
    %c0_7 = arith.constant 0 : index
    %c0_8 = arith.constant 0 : index
    %14 = vector.load %arg7[%13, %c0_7, %c0_8] : memref<8x8x128xf32, #tpu.memory_space<vmem>>, vector<1x8x128xf32>
    %15 = vector.shape_cast %14 : vector<1x8x128xf32> to vector<8x128xf32>
    %16 = vector.shape_cast %12 : vector<8x128xf32> to vector<1x8x128xf32>
    tpu.vector_store %arg7[%13, %c0_7, %c0_8], %16 {strides = array<i32>} : memref<8x8x128xf32, #tpu.memory_space<vmem>>, vector<1x8x128xf32>,
    %c1_i32 = arith.constant 1 : i32
    %17 = arith.index_cast %c1_i32 : i32 to index
    %c0_9 = arith.constant 0 : index
    %c0_10 = arith.constant 0 : index
    %18 = vector.load %arg1[%17, %c0_9, %c0_10] : memref<8x8x128xbf16, #tpu.memory_space<vmem>>, vector<1x8x128xbf16>
    %19 = vector.shape_cast %18 : vector<1x8x128xbf16> to vector<8x128xbf16>
    %20 = arith.extf %19 : vector<8x128xbf16> to vector<8x128xf32>
    %21 = arith.truncf %12 : vector<8x128xf32> to vector<8x128xbf16>
    %cst_11 = arith.constant dense<0.000000e+00> : vector<8x128xf32>
    %22 = tpu.matmul %21, %3, %cst_11 {dimension_numbers = #tpu.dot_dimension_numbers<[1], [0], [0], [1], [0, 0, 1, 1], [], []>} : vector<8x128xbf16>, vector<128x128xbf16>, vector<8x128xf32> -> vector<8x128xf32>
    %23 = arith.addf %20, %22 : vector<8x128xf32>
    %24 = math.tanh %23 : vector<8x128xf32>
    %25 = arith.index_cast %c1_i32 : i32 to index
    %c0_12 = arith.constant 0 : index
    %c0_13 = arith.constant 0 : index
    %26 = vector.load %arg7[%25, %c0_12, %c0_13] : memref<8x8x128xf32, #tpu.memory_space<vmem>>, vector<1x8x128xf32>
    %27 = vector.shape_cast %26 : vector<1x8x128xf32> to vector<8x128xf32>
    %28 = vector.shape_cast %24 : vector<8x128xf32> to vector<1x8x128xf32>
    tpu.vector_store %arg7[%25, %c0_12, %c0_13], %28 {strides = array<i32>} : memref<8x8x128xf32, #tpu.memory_space<vmem>>, vector<1x8x128xf32>,
    %c2_i32 = arith.constant 2 : i32
    %29 = arith.index_cast %c2_i32 : i32 to index
    %c0_14 = arith.constant 0 : index
    %c0_15 = arith.constant 0 : index
    %30 = vector.load %arg1[%29, %c0_14, %c0_15] : memref<8x8x128xbf16, #tpu.memory_space<vmem>>, vector<1x8x128xbf16>
    %31 = vector.shape_cast %30 : vector<1x8x128xbf16> to vector<8x128xbf16>
    %32 = arith.extf %31 : vector<8x128xbf16> to vector<8x128xf32>
    %33 = arith.truncf %24 : vector<8x128xf32> to vector<8x128xbf16>
    %cst_16 = arith.constant dense<0.000000e+00> : vector<8x128xf32>
    %34 = tpu.matmul %33, %3, %cst_16 {dimension_numbers = #tpu.dot_dimension_numbers<[1], [0], [0], [1], [0, 0, 1, 1], [], []>} : vector<8x128xbf16>, vector<128x128xbf16>, vector<8x128xf32> -> vector<8x128xf32>
    %35 = arith.addf %32, %34 : vector<8x128xf32>
    %36 = math.tanh %35 : vector<8x128xf32>
    %37 = arith.index_cast %c2_i32 : i32 to index
    %c0_17 = arith.constant 0 : index
    %c0_18 = arith.constant 0 : index
    %38 = vector.load %arg7[%37, %c0_17, %c0_18] : memref<8x8x128xf32, #tpu.memory_space<vmem>>, vector<1x8x128xf32>
    %39 = vector.shape_cast %38 : vector<1x8x128xf32> to vector<8x128xf32>
    %40 = vector.shape_cast %36 : vector<8x128xf32> to vector<1x8x128xf32>
    tpu.vector_store %arg7[%37, %c0_17, %c0_18], %40 {strides = array<i32>} : memref<8x8x128xf32, #tpu.memory_space<vmem>>, vector<1x8x128xf32>,
    %c3_i32 = arith.constant 3 : i32
    %41 = arith.index_cast %c3_i32 : i32 to index
    %c0_19 = arith.constant 0 : index
    %c0_20 = arith.constant 0 : index
    %42 = vector.load %arg1[%41, %c0_19, %c0_20] : memref<8x8x128xbf16, #tpu.memory_space<vmem>>, vector<1x8x128xbf16>
    %43 = vector.shape_cast %42 : vector<1x8x128xbf16> to vector<8x128xbf16>
    %44 = arith.extf %43 : vector<8x128xbf16> to vector<8x128xf32>
    %45 = arith.truncf %36 : vector<8x128xf32> to vector<8x128xbf16>
    %cst_21 = arith.constant dense<0.000000e+00> : vector<8x128xf32>
    %46 = tpu.matmul %45, %3, %cst_21 {dimension_numbers = #tpu.dot_dimension_numbers<[1], [0], [0], [1], [0, 0, 1, 1], [], []>} : vector<8x128xbf16>, vector<128x128xbf16>, vector<8x128xf32> -> vector<8x128xf32>
    %47 = arith.addf %44, %46 : vector<8x128xf32>
    %48 = math.tanh %47 : vector<8x128xf32>
    %49 = arith.index_cast %c3_i32 : i32 to index
    %c0_22 = arith.constant 0 : index
    %c0_23 = arith.constant 0 : index
    %50 = vector.load %arg7[%49, %c0_22, %c0_23] : memref<8x8x128xf32, #tpu.memory_space<vmem>>, vector<1x8x128xf32>
    %51 = vector.shape_cast %50 : vector<1x8x128xf32> to vector<8x128xf32>
    %52 = vector.shape_cast %48 : vector<8x128xf32> to vector<1x8x128xf32>
    tpu.vector_store %arg7[%49, %c0_22, %c0_23], %52 {strides = array<i32>} : memref<8x8x128xf32, #tpu.memory_space<vmem>>, vector<1x8x128xf32>,
    %c4_i32 = arith.constant 4 : i32
    %53 = arith.index_cast %c4_i32 : i32 to index
    %c0_24 = arith.constant 0 : index
    %c0_25 = arith.constant 0 : index
    %54 = vector.load %arg1[%53, %c0_24, %c0_25] : memref<8x8x128xbf16, #tpu.memory_space<vmem>>, vector<1x8x128xbf16>
    %55 = vector.shape_cast %54 : vector<1x8x128xbf16> to vector<8x128xbf16>
    %56 = arith.extf %55 : vector<8x128xbf16> to vector<8x128xf32>
    %57 = arith.truncf %48 : vector<8x128xf32> to vector<8x128xbf16>
    %cst_26 = arith.constant dense<0.000000e+00> : vector<8x128xf32>
    %58 = tpu.matmul %57, %3, %cst_26 {dimension_numbers = #tpu.dot_dimension_numbers<[1], [0], [0], [1], [0, 0, 1, 1], [], []>} : vector<8x128xbf16>, vector<128x128xbf16>, vector<8x128xf32> -> vector<8x128xf32>
    %59 = arith.addf %56, %58 : vector<8x128xf32>
    %60 = math.tanh %59 : vector<8x128xf32>
    %61 = arith.index_cast %c4_i32 : i32 to index
    %c0_27 = arith.constant 0 : index
    %c0_28 = arith.constant 0 : index
    %62 = vector.load %arg7[%61, %c0_27, %c0_28] : memref<8x8x128xf32, #tpu.memory_space<vmem>>, vector<1x8x128xf32>
    %63 = vector.shape_cast %62 : vector<1x8x128xf32> to vector<8x128xf32>
    %64 = vector.shape_cast %60 : vector<8x128xf32> to vector<1x8x128xf32>
    tpu.vector_store %arg7[%61, %c0_27, %c0_28], %64 {strides = array<i32>} : memref<8x8x128xf32, #tpu.memory_space<vmem>>, vector<1x8x128xf32>,
    %c5_i32 = arith.constant 5 : i32
    %65 = arith.index_cast %c5_i32 : i32 to index
    %c0_29 = arith.constant 0 : index
    %c0_30 = arith.constant 0 : index
    %66 = vector.load %arg1[%65, %c0_29, %c0_30] : memref<8x8x128xbf16, #tpu.memory_space<vmem>>, vector<1x8x128xbf16>
    %67 = vector.shape_cast %66 : vector<1x8x128xbf16> to vector<8x128xbf16>
    %68 = arith.extf %67 : vector<8x128xbf16> to vector<8x128xf32>
    %69 = arith.truncf %60 : vector<8x128xf32> to vector<8x128xbf16>
    %cst_31 = arith.constant dense<0.000000e+00> : vector<8x128xf32>
    %70 = tpu.matmul %69, %3, %cst_31 {dimension_numbers = #tpu.dot_dimension_numbers<[1], [0], [0], [1], [0, 0, 1, 1], [], []>} : vector<8x128xbf16>, vector<128x128xbf16>, vector<8x128xf32> -> vector<8x128xf32>
    %71 = arith.addf %68, %70 : vector<8x128xf32>
    %72 = math.tanh %71 : vector<8x128xf32>
    %73 = arith.index_cast %c5_i32 : i32 to index
    %c0_32 = arith.constant 0 : index
    %c0_33 = arith.constant 0 : index
    %74 = vector.load %arg7[%73, %c0_32, %c0_33] : memref<8x8x128xf32, #tpu.memory_space<vmem>>, vector<1x8x128xf32>
    %75 = vector.shape_cast %74 : vector<1x8x128xf32> to vector<8x128xf32>
    %76 = vector.shape_cast %72 : vector<8x128xf32> to vector<1x8x128xf32>
    tpu.vector_store %arg7[%73, %c0_32, %c0_33], %76 {strides = array<i32>} : memref<8x8x128xf32, #tpu.memory_space<vmem>>, vector<1x8x128xf32>,
    %c6_i32 = arith.constant 6 : i32
    %77 = arith.index_cast %c6_i32 : i32 to index
    %c0_34 = arith.constant 0 : index
    %c0_35 = arith.constant 0 : index
    %78 = vector.load %arg1[%77, %c0_34, %c0_35] : memref<8x8x128xbf16, #tpu.memory_space<vmem>>, vector<1x8x128xbf16>
    %79 = vector.shape_cast %78 : vector<1x8x128xbf16> to vector<8x128xbf16>
    %80 = arith.extf %79 : vector<8x128xbf16> to vector<8x128xf32>
    %81 = arith.truncf %72 : vector<8x128xf32> to vector<8x128xbf16>
    %cst_36 = arith.constant dense<0.000000e+00> : vector<8x128xf32>
    %82 = tpu.matmul %81, %3, %cst_36 {dimension_numbers = #tpu.dot_dimension_numbers<[1], [0], [0], [1], [0, 0, 1, 1], [], []>} : vector<8x128xbf16>, vector<128x128xbf16>, vector<8x128xf32> -> vector<8x128xf32>
    %83 = arith.addf %80, %82 : vector<8x128xf32>
    %84 = math.tanh %83 : vector<8x128xf32>
    %85 = arith.index_cast %c6_i32 : i32 to index
    %c0_37 = arith.constant 0 : index
    %c0_38 = arith.constant 0 : index
    %86 = vector.load %arg7[%85, %c0_37, %c0_38] : memref<8x8x128xf32, #tpu.memory_space<vmem>>, vector<1x8x128xf32>
    %87 = vector.shape_cast %86 : vector<1x8x128xf32> to vector<8x128xf32>
    %88 = vector.shape_cast %84 : vector<8x128xf32> to vector<1x8x128xf32>
    tpu.vector_store %arg7[%85, %c0_37, %c0_38], %88 {strides = array<i32>} : memref<8x8x128xf32, #tpu.memory_space<vmem>>, vector<1x8x128xf32>,
    %c7_i32 = arith.constant 7 : i32
    %89 = arith.index_cast %c7_i32 : i32 to index
    %c0_39 = arith.constant 0 : index
    %c0_40 = arith.constant 0 : index
    %90 = vector.load %arg1[%89, %c0_39, %c0_40] : memref<8x8x128xbf16, #tpu.memory_space<vmem>>, vector<1x8x128xbf16>
    %91 = vector.shape_cast %90 : vector<1x8x128xbf16> to vector<8x128xbf16>
    %92 = arith.extf %91 : vector<8x128xbf16> to vector<8x128xf32>
    %93 = arith.truncf %84 : vector<8x128xf32> to vector<8x128xbf16>
    %cst_41 = arith.constant dense<0.000000e+00> : vector<8x128xf32>
    %94 = tpu.matmul %93, %3, %cst_41 {dimension_numbers = #tpu.dot_dimension_numbers<[1], [0], [0], [1], [0, 0, 1, 1], [], []>} : vector<8x128xbf16>, vector<128x128xbf16>, vector<8x128xf32> -> vector<8x128xf32>
    %95 = arith.addf %92, %94 : vector<8x128xf32>
    %96 = math.tanh %95 : vector<8x128xf32>
    %97 = arith.index_cast %c7_i32 : i32 to index
    %c0_42 = arith.constant 0 : index
    %c0_43 = arith.constant 0 : index
    %98 = vector.load %arg7[%97, %c0_42, %c0_43] : memref<8x8x128xf32, #tpu.memory_space<vmem>>, vector<1x8x128xf32>
    %99 = vector.shape_cast %98 : vector<1x8x128xf32> to vector<8x128xf32>
    %100 = vector.shape_cast %96 : vector<8x128xf32> to vector<1x8x128xf32>
    tpu.vector_store %arg7[%97, %c0_42, %c0_43], %100 {strides = array<i32>} : memref<8x8x128xf32, #tpu.memory_space<vmem>>, vector<1x8x128xf32>,
    %c8_i32 = arith.constant 8 : i32
    %c0_44 = arith.constant 0 : index
    %c0_45 = arith.constant 0 : index
    %101 = vector.load %arg6[%c0_44, %c0_45] : memref<8x128xf32, #tpu.memory_space<vmem>>, vector<8x128xf32>
    tpu.vector_store %arg6[%c0_44, %c0_45], %96 {strides = array<i32>} : memref<8x128xf32, #tpu.memory_space<vmem>>, vector<8x128xf32>,
    %c0_46 = arith.constant 0 : index
    %c0_47 = arith.constant 0 : index
    %c0_48 = arith.constant 0 : index
    %102 = vector.load %arg7[%c0_46, %c0_47, %c0_48] : memref<8x8x128xf32, #tpu.memory_space<vmem>>, vector<8x8x128xf32>
    %103 = vector.shape_cast %102 : vector<8x8x128xf32> to vector<64x128xf32>
    %104 = arith.truncf %103 : vector<64x128xf32> to vector<64x128xbf16>
    %c0_49 = arith.constant 0 : index
    %c0_50 = arith.constant 0 : index
    %105 = vector.load %arg3[%c0_49, %c0_50] : memref<128x128xbf16, #tpu.memory_space<vmem>>, vector<128x128xbf16>
    %cst_51 = arith.constant dense<0.000000e+00> : vector<64x128xf32>
    %106 = tpu.matmul %104, %105, %cst_51 {dimension_numbers = #tpu.dot_dimension_numbers<[1], [0], [0], [1], [0, 0, 1, 1], [], []>} : vector<64x128xbf16>, vector<128x128xbf16>, vector<64x128xf32> -> vector<64x128xf32>
    %c0_52 = arith.constant 0 : index
    %c0_53 = arith.constant 0 : index
    %107 = vector.load %arg4[%c0_52, %c0_53] : memref<1x128xf32, #tpu.memory_space<vmem>>, vector<1x128xf32>
    %108 = vector.broadcast %107 : vector<1x128xf32> to vector<64x128xf32>
    %109 = arith.addf %106, %108 : vector<64x128xf32>
    %110 = vector.shape_cast %109 : vector<64x128xf32> to vector<8x8x128xf32>
    %111 = arith.truncf %110 : vector<8x8x128xf32> to vector<8x8x128xbf16>
    %c0_54 = arith.constant 0 : index
    %c0_55 = arith.constant 0 : index
    %c0_56 = arith.constant 0 : index
    %112 = vector.load %arg5[%c0_54, %c0_55, %c0_56] : memref<8x8x128xbf16, #tpu.memory_space<vmem>>, vector<8x8x128xbf16>
    tpu.vector_store %arg5[%c0_54, %c0_55, %c0_56], %111 {strides = array<i32>} : memref<8x8x128xbf16, #tpu.memory_space<vmem>>, vector<8x8x128xbf16>,
    return
  }
  func.func @transform_0(%arg0: i32) -> (i32, i32, i32) {
    %c0_i32 = arith.constant 0 : i32
    %c0_i32_0 = arith.constant 0 : i32
    %c0_i32_1 = arith.constant 0 : i32
    return %arg0, %c0_i32, %c0_i32_0 : i32, i32, i32
  }
  func.func @transform_1(%arg0: i32) -> (i32, i32) {
    %c0_i32 = arith.constant 0 : i32
    %c0_i32_0 = arith.constant 0 : i32
    %c0_i32_1 = arith.constant 0 : i32
    return %c0_i32, %c0_i32_0 : i32, i32
  }
  func.func @transform_2(%arg0: i32) -> (i32, i32) {
    %c0_i32 = arith.constant 0 : i32
    %c0_i32_0 = arith.constant 0 : i32
    %c0_i32_1 = arith.constant 0 : i32
    return %c0_i32, %c0_i32_0 : i32, i32
  }
  func.func @transform_3(%arg0: i32) -> (i32, i32) {
    %c0_i32 = arith.constant 0 : i32
    %c0_i32_0 = arith.constant 0 : i32
    %c0_i32_1 = arith.constant 0 : i32
    return %c0_i32, %c0_i32_0 : i32, i32
  }
  func.func @transform_4(%arg0: i32) -> (i32, i32, i32) {
    %c0_i32 = arith.constant 0 : i32
    %c0_i32_0 = arith.constant 0 : i32
    %c0_i32_1 = arith.constant 0 : i32
    return %arg0, %c0_i32, %c0_i32_0 : i32, i32, i32
  }
}

module attributes {stable_mosaic.version = 11 : i64} {
  func.func @_rnn_last_kernel(%arg0: i32, %arg1: memref<8x8x128xbf16, #tpu.memory_space<vmem>>, %arg2: memref<128x128xbf16, #tpu.memory_space<vmem>>, %arg3: memref<128x128xbf16, #tpu.memory_space<vmem>>, %arg4: memref<1x128xf32, #tpu.memory_space<vmem>>, %arg5: memref<8x128xf32, #tpu.memory_space<vmem>>, %arg6: memref<8x128xf32, #tpu.memory_space<vmem>>) attributes {dimension_semantics = [#tpu.dimension_semantics<arbitrary>], iteration_bounds = array<i64: 1>, scalar_prefetch = 0 : i64, scratch_operands = 1 : i64, tpu.core_type = #tpu.core_type<tc>, window_params = [{transform_indices = @transform_0, window_bounds = array<i64: 8, 8, 128>}, {pipeline_mode = #tpu.pipeline_mode<synchronous>, transform_indices = @transform_1, window_bounds = array<i64: 128, 128>}, {pipeline_mode = #tpu.pipeline_mode<synchronous>, transform_indices = @transform_2, window_bounds = array<i64: 128, 128>}, {pipeline_mode = #tpu.pipeline_mode<synchronous>, transform_indices = @transform_3, window_bounds = array<i64: 1, 128>}, {pipeline_mode = #tpu.pipeline_mode<synchronous>, transform_indices = @transform_4, window_bounds = array<i64: 8, 128>}]} {
    %c0_i32 = arith.constant 0 : i32
    %0 = arith.cmpi eq, %arg0, %c0_i32 : i32
    %1 = arith.extui %0 : i1 to i32
    %c0_i32_0 = arith.constant 0 : i32
    %2 = arith.cmpi ne, %1, %c0_i32_0 : i32
    scf.if %2 {
      %cst_32 = arith.constant 0.000000e+00 : f32
      %73 = vector.broadcast %cst_32 : f32 to vector<8x128xf32>
      %c0_33 = arith.constant 0 : index
      %c0_34 = arith.constant 0 : index
      %74 = vector.load %arg6[%c0_33, %c0_34] : memref<8x128xf32, #tpu.memory_space<vmem>>, vector<8x128xf32>
      tpu.vector_store %arg6[%c0_33, %c0_34], %73 {strides = array<i32>} : memref<8x128xf32, #tpu.memory_space<vmem>>, vector<8x128xf32>,
    } else {
    }
    %c0 = arith.constant 0 : index
    %c0_1 = arith.constant 0 : index
    %3 = vector.load %arg2[%c0, %c0_1] : memref<128x128xbf16, #tpu.memory_space<vmem>>, vector<128x128xbf16>
    %c0_2 = arith.constant 0 : index
    %c0_3 = arith.constant 0 : index
    %4 = vector.load %arg6[%c0_2, %c0_3] : memref<8x128xf32, #tpu.memory_space<vmem>>, vector<8x128xf32>
    %c0_i32_4 = arith.constant 0 : i32
    %5 = arith.index_cast %c0_i32_4 : i32 to index
    %c0_5 = arith.constant 0 : index
    %c0_6 = arith.constant 0 : index
    %6 = vector.load %arg1[%5, %c0_5, %c0_6] : memref<8x8x128xbf16, #tpu.memory_space<vmem>>, vector<1x8x128xbf16>
    %7 = vector.shape_cast %6 : vector<1x8x128xbf16> to vector<8x128xbf16>
    %8 = arith.extf %7 : vector<8x128xbf16> to vector<8x128xf32>
    %9 = arith.truncf %4 : vector<8x128xf32> to vector<8x128xbf16>
    %cst = arith.constant dense<0.000000e+00> : vector<8x128xf32>
    %10 = tpu.matmul %9, %3, %cst {dimension_numbers = #tpu.dot_dimension_numbers<[1], [0], [0], [1], [0, 0, 1, 1], [], []>} : vector<8x128xbf16>, vector<128x128xbf16>, vector<8x128xf32> -> vector<8x128xf32>
    %11 = arith.addf %8, %10 : vector<8x128xf32>
    %12 = math.tanh %11 : vector<8x128xf32>
    %c1_i32 = arith.constant 1 : i32
    %13 = arith.index_cast %c1_i32 : i32 to index
    %c0_7 = arith.constant 0 : index
    %c0_8 = arith.constant 0 : index
    %14 = vector.load %arg1[%13, %c0_7, %c0_8] : memref<8x8x128xbf16, #tpu.memory_space<vmem>>, vector<1x8x128xbf16>
    %15 = vector.shape_cast %14 : vector<1x8x128xbf16> to vector<8x128xbf16>
    %16 = arith.extf %15 : vector<8x128xbf16> to vector<8x128xf32>
    %17 = arith.truncf %12 : vector<8x128xf32> to vector<8x128xbf16>
    %cst_9 = arith.constant dense<0.000000e+00> : vector<8x128xf32>
    %18 = tpu.matmul %17, %3, %cst_9 {dimension_numbers = #tpu.dot_dimension_numbers<[1], [0], [0], [1], [0, 0, 1, 1], [], []>} : vector<8x128xbf16>, vector<128x128xbf16>, vector<8x128xf32> -> vector<8x128xf32>
    %19 = arith.addf %16, %18 : vector<8x128xf32>
    %20 = math.tanh %19 : vector<8x128xf32>
    %c2_i32 = arith.constant 2 : i32
    %21 = arith.index_cast %c2_i32 : i32 to index
    %c0_10 = arith.constant 0 : index
    %c0_11 = arith.constant 0 : index
    %22 = vector.load %arg1[%21, %c0_10, %c0_11] : memref<8x8x128xbf16, #tpu.memory_space<vmem>>, vector<1x8x128xbf16>
    %23 = vector.shape_cast %22 : vector<1x8x128xbf16> to vector<8x128xbf16>
    %24 = arith.extf %23 : vector<8x128xbf16> to vector<8x128xf32>
    %25 = arith.truncf %20 : vector<8x128xf32> to vector<8x128xbf16>
    %cst_12 = arith.constant dense<0.000000e+00> : vector<8x128xf32>
    %26 = tpu.matmul %25, %3, %cst_12 {dimension_numbers = #tpu.dot_dimension_numbers<[1], [0], [0], [1], [0, 0, 1, 1], [], []>} : vector<8x128xbf16>, vector<128x128xbf16>, vector<8x128xf32> -> vector<8x128xf32>
    %27 = arith.addf %24, %26 : vector<8x128xf32>
    %28 = math.tanh %27 : vector<8x128xf32>
    %c3_i32 = arith.constant 3 : i32
    %29 = arith.index_cast %c3_i32 : i32 to index
    %c0_13 = arith.constant 0 : index
    %c0_14 = arith.constant 0 : index
    %30 = vector.load %arg1[%29, %c0_13, %c0_14] : memref<8x8x128xbf16, #tpu.memory_space<vmem>>, vector<1x8x128xbf16>
    %31 = vector.shape_cast %30 : vector<1x8x128xbf16> to vector<8x128xbf16>
    %32 = arith.extf %31 : vector<8x128xbf16> to vector<8x128xf32>
    %33 = arith.truncf %28 : vector<8x128xf32> to vector<8x128xbf16>
    %cst_15 = arith.constant dense<0.000000e+00> : vector<8x128xf32>
    %34 = tpu.matmul %33, %3, %cst_15 {dimension_numbers = #tpu.dot_dimension_numbers<[1], [0], [0], [1], [0, 0, 1, 1], [], []>} : vector<8x128xbf16>, vector<128x128xbf16>, vector<8x128xf32> -> vector<8x128xf32>
    %35 = arith.addf %32, %34 : vector<8x128xf32>
    %36 = math.tanh %35 : vector<8x128xf32>
    %c4_i32 = arith.constant 4 : i32
    %37 = arith.index_cast %c4_i32 : i32 to index
    %c0_16 = arith.constant 0 : index
    %c0_17 = arith.constant 0 : index
    %38 = vector.load %arg1[%37, %c0_16, %c0_17] : memref<8x8x128xbf16, #tpu.memory_space<vmem>>, vector<1x8x128xbf16>
    %39 = vector.shape_cast %38 : vector<1x8x128xbf16> to vector<8x128xbf16>
    %40 = arith.extf %39 : vector<8x128xbf16> to vector<8x128xf32>
    %41 = arith.truncf %36 : vector<8x128xf32> to vector<8x128xbf16>
    %cst_18 = arith.constant dense<0.000000e+00> : vector<8x128xf32>
    %42 = tpu.matmul %41, %3, %cst_18 {dimension_numbers = #tpu.dot_dimension_numbers<[1], [0], [0], [1], [0, 0, 1, 1], [], []>} : vector<8x128xbf16>, vector<128x128xbf16>, vector<8x128xf32> -> vector<8x128xf32>
    %43 = arith.addf %40, %42 : vector<8x128xf32>
    %44 = math.tanh %43 : vector<8x128xf32>
    %c5_i32 = arith.constant 5 : i32
    %45 = arith.index_cast %c5_i32 : i32 to index
    %c0_19 = arith.constant 0 : index
    %c0_20 = arith.constant 0 : index
    %46 = vector.load %arg1[%45, %c0_19, %c0_20] : memref<8x8x128xbf16, #tpu.memory_space<vmem>>, vector<1x8x128xbf16>
    %47 = vector.shape_cast %46 : vector<1x8x128xbf16> to vector<8x128xbf16>
    %48 = arith.extf %47 : vector<8x128xbf16> to vector<8x128xf32>
    %49 = arith.truncf %44 : vector<8x128xf32> to vector<8x128xbf16>
    %cst_21 = arith.constant dense<0.000000e+00> : vector<8x128xf32>
    %50 = tpu.matmul %49, %3, %cst_21 {dimension_numbers = #tpu.dot_dimension_numbers<[1], [0], [0], [1], [0, 0, 1, 1], [], []>} : vector<8x128xbf16>, vector<128x128xbf16>, vector<8x128xf32> -> vector<8x128xf32>
    %51 = arith.addf %48, %50 : vector<8x128xf32>
    %52 = math.tanh %51 : vector<8x128xf32>
    %c6_i32 = arith.constant 6 : i32
    %53 = arith.index_cast %c6_i32 : i32 to index
    %c0_22 = arith.constant 0 : index
    %c0_23 = arith.constant 0 : index
    %54 = vector.load %arg1[%53, %c0_22, %c0_23] : memref<8x8x128xbf16, #tpu.memory_space<vmem>>, vector<1x8x128xbf16>
    %55 = vector.shape_cast %54 : vector<1x8x128xbf16> to vector<8x128xbf16>
    %56 = arith.extf %55 : vector<8x128xbf16> to vector<8x128xf32>
    %57 = arith.truncf %52 : vector<8x128xf32> to vector<8x128xbf16>
    %cst_24 = arith.constant dense<0.000000e+00> : vector<8x128xf32>
    %58 = tpu.matmul %57, %3, %cst_24 {dimension_numbers = #tpu.dot_dimension_numbers<[1], [0], [0], [1], [0, 0, 1, 1], [], []>} : vector<8x128xbf16>, vector<128x128xbf16>, vector<8x128xf32> -> vector<8x128xf32>
    %59 = arith.addf %56, %58 : vector<8x128xf32>
    %60 = math.tanh %59 : vector<8x128xf32>
    %c7_i32 = arith.constant 7 : i32
    %61 = arith.index_cast %c7_i32 : i32 to index
    %c0_25 = arith.constant 0 : index
    %c0_26 = arith.constant 0 : index
    %62 = vector.load %arg1[%61, %c0_25, %c0_26] : memref<8x8x128xbf16, #tpu.memory_space<vmem>>, vector<1x8x128xbf16>
    %63 = vector.shape_cast %62 : vector<1x8x128xbf16> to vector<8x128xbf16>
    %64 = arith.extf %63 : vector<8x128xbf16> to vector<8x128xf32>
    %65 = arith.truncf %60 : vector<8x128xf32> to vector<8x128xbf16>
    %cst_27 = arith.constant dense<0.000000e+00> : vector<8x128xf32>
    %66 = tpu.matmul %65, %3, %cst_27 {dimension_numbers = #tpu.dot_dimension_numbers<[1], [0], [0], [1], [0, 0, 1, 1], [], []>} : vector<8x128xbf16>, vector<128x128xbf16>, vector<8x128xf32> -> vector<8x128xf32>
    %67 = arith.addf %64, %66 : vector<8x128xf32>
    %68 = math.tanh %67 : vector<8x128xf32>
    %c8_i32 = arith.constant 8 : i32
    %c0_28 = arith.constant 0 : index
    %c0_29 = arith.constant 0 : index
    %69 = vector.load %arg6[%c0_28, %c0_29] : memref<8x128xf32, #tpu.memory_space<vmem>>, vector<8x128xf32>
    tpu.vector_store %arg6[%c0_28, %c0_29], %68 {strides = array<i32>} : memref<8x128xf32, #tpu.memory_space<vmem>>, vector<8x128xf32>,
    %c0_i32_30 = arith.constant 0 : i32
    %70 = arith.cmpi eq, %arg0, %c0_i32_30 : i32
    %71 = arith.extui %70 : i1 to i32
    %c0_i32_31 = arith.constant 0 : i32
    %72 = arith.cmpi ne, %71, %c0_i32_31 : i32
    scf.if %72 {
      %73 = arith.truncf %68 : vector<8x128xf32> to vector<8x128xbf16>
      %c0_32 = arith.constant 0 : index
      %c0_33 = arith.constant 0 : index
      %74 = vector.load %arg3[%c0_32, %c0_33] : memref<128x128xbf16, #tpu.memory_space<vmem>>, vector<128x128xbf16>
      %cst_34 = arith.constant dense<0.000000e+00> : vector<8x128xf32>
      %75 = tpu.matmul %73, %74, %cst_34 {dimension_numbers = #tpu.dot_dimension_numbers<[1], [0], [0], [1], [0, 0, 1, 1], [], []>} : vector<8x128xbf16>, vector<128x128xbf16>, vector<8x128xf32> -> vector<8x128xf32>
      %c0_35 = arith.constant 0 : index
      %c0_36 = arith.constant 0 : index
      %76 = vector.load %arg4[%c0_35, %c0_36] : memref<1x128xf32, #tpu.memory_space<vmem>>, vector<1x128xf32>
      %77 = vector.broadcast %76 : vector<1x128xf32> to vector<8x128xf32>
      %78 = arith.addf %75, %77 : vector<8x128xf32>
      %c0_37 = arith.constant 0 : index
      %c0_38 = arith.constant 0 : index
      %79 = vector.load %arg5[%c0_37, %c0_38] : memref<8x128xf32, #tpu.memory_space<vmem>>, vector<8x128xf32>
      tpu.vector_store %arg5[%c0_37, %c0_38], %78 {strides = array<i32>} : memref<8x128xf32, #tpu.memory_space<vmem>>, vector<8x128xf32>,
    } else {
    }
    return
  }
  func.func @transform_0(%arg0: i32) -> (i32, i32, i32) {
    %c0_i32 = arith.constant 0 : i32
    %c0_i32_0 = arith.constant 0 : i32
    %c0_i32_1 = arith.constant 0 : i32
    return %arg0, %c0_i32, %c0_i32_0 : i32, i32, i32
  }
  func.func @transform_1(%arg0: i32) -> (i32, i32) {
    %c0_i32 = arith.constant 0 : i32
    %c0_i32_0 = arith.constant 0 : i32
    %c0_i32_1 = arith.constant 0 : i32
    return %c0_i32, %c0_i32_0 : i32, i32
  }
  func.func @transform_2(%arg0: i32) -> (i32, i32) {
    %c0_i32 = arith.constant 0 : i32
    %c0_i32_0 = arith.constant 0 : i32
    %c0_i32_1 = arith.constant 0 : i32
    return %c0_i32, %c0_i32_0 : i32, i32
  }
  func.func @transform_3(%arg0: i32) -> (i32, i32) {
    %c0_i32 = arith.constant 0 : i32
    %c0_i32_0 = arith.constant 0 : i32
    %c0_i32_1 = arith.constant 0 : i32
    return %c0_i32, %c0_i32_0 : i32, i32
  }
  func.func @transform_4(%arg0: i32) -> (i32, i32) {
    %c0_i32 = arith.constant 0 : i32
    %c0_i32_0 = arith.constant 0 : i32
    %c0_i32_1 = arith.constant 0 : i32
    return %c0_i32, %c0_i32_0 : i32, i32
  }
}

</mosaic_0001>

<llo_original>
// kernel: simple_rnn_forward.3
$region0: #{simple_rnn_forward.3}
  #allocation0 [shape = 'u32[]', space=smem, size = 0x4, offset = 0x4, fixed_abs, tag = 'smem constant byte address 0x4 - core index']
  #allocation1 [shape = 'u32[144,128]{1,0:T(1,128)}', space=vmem, size = 0x12000, scoped, tag = 'internal scratch']
  %s0 = inlined_call_operand.vmem [shape: bf16[64,16], index: 0, kind: input, shape index: {}]
  %s1 = inlined_call_operand.vmem [shape: bf16[16,128], index: 1, kind: input, shape index: {}]
  %s2 = inlined_call_operand.vmem [shape: f32[1,128], index: 2, kind: input, shape index: {}]
  %s3 = inlined_call_operand.vmem [shape: bf16[64,128], index: 3, kind: output, shape index: {}]
  %s4 = sld [smem:[#allocation0]]
  $region22: #{simple_rnn_forward.3} parent=0
    _
  %s6 = ssub.s32 1, %s4
  %s7 = scalar_select 0, %s6, %s4
  // Predicated region
  $region2: #{simple_rnn_forward.3} parent=0 // pred_check
    _
  $region3: #{simple_rnn_forward.3} parent=0 // pred_check_branch
    %9 = sbr.rel (0) target = $region5
  $region4: #{simple_rnn_forward.3} parent=0 // pred_region
    _
  $region5: #{simple_rnn_forward.3} parent=0 // pred_fallthru
    _
  // Predicated region
  $region6: #{simple_rnn_forward.3} parent=0 // pred_check
    _
  $region7: #{simple_rnn_forward.3} parent=0 // pred_check_branch
    %11 = sbr.rel (0) target = $region9
  $region8: #{simple_rnn_forward.3} parent=0 // pred_region
    _
  $region9: #{simple_rnn_forward.3} parent=0 // pred_fallthru
    _
  // Predicated region
  $region10: #{simple_rnn_forward.3} parent=0 // pred_check
    _
  $region11: #{simple_rnn_forward.3} parent=0 // pred_check_branch
    %13 = sbr.rel (0) target = $region13
  $region12: #{simple_rnn_forward.3} parent=0 // pred_region
    _
  $region13: #{simple_rnn_forward.3} parent=0 // pred_fallthru
    _
  %v15 = vld [vmem:[%s0] sm:$0xf]
  %v16 = vld [vmem:[%s0 + $0x4] sm:$0xf]
  %v17 = vld [vmem:[%s0 + $0x8] sm:$0xf]
  %v18 = vld [vmem:[%s0 + $0xc] sm:$0xf]
  %v19 = vld [vmem:[%s0 + $0x10] sm:$0xf]
  %v20 = vld [vmem:[%s0 + $0x14] sm:$0xf]
  %v21 = vld [vmem:[%s0 + $0x18] sm:$0xf]
  %v22 = vld [vmem:[%s0 + $0x1c] sm:$0xf]
  %v23 = vld [vmem:[%s1] sm:$0xf]
  %v24 = vld [vmem:[%s1 + $0x4] sm:$0xf]
  %v25 = vld [vmem:[%s2] sm:$0x1]
  %v27 = vlaneseq
  %v28 = vshrl.u32 %v27, 7
  %v29 = vsub.s32 0, %v28
  %v30 = vrot.slane %v25, %v29
  %v40 = vunpack.c.l.b16 %v15
  %v41 = vunpack.c.l.b16 %v16
  %v42 = vunpack.c.l.b16 %v17
  %v43 = vunpack.c.l.b16 %v18
  %v44 = vunpack.c.l.b16 %v19
  %v45 = vunpack.c.l.b16 %v20
  %v46 = vunpack.c.l.b16 %v21
  %v47 = vunpack.c.l.b16 %v22
  %v48 = vpack.c.b16 %v41, %v40
  %v49 = vpack.c.b16 %v43, %v42
  %v50 = vpack.c.b16 %v45, %v44
  %v51 = vpack.c.b16 %v47, %v46
  %v54 = vunpack.c.l.b16 %v23
  %v55 = vunpack.c.l.b16 %v24
  %v56 = vpack.c.b16 %v55, %v54
  %vm58 = vcmask 130048
  %v60 = vsel %vm58, %v48, 0
  %v63 = vsel %vm58, %v49, 0
  %v66 = vsel %vm58, %v50, 0
  %v69 = vsel %vm58, %v51, 0
  %71 = vmatprep.subr.bf16.mxu0 0
  %72 = vmatpush1.bf16.msra.mxu0 0
  %73 = vmatprep.subr.bf16.mxu0 0
  %74 = vmatpush1.bf16.msra.mxu0 0
  %75 = vmatprep.subr.bf16.mxu0 0
  %76 = vmatpush1.bf16.msra.mxu0 0
  %77 = vmatprep.subr.bf16.mxu0 0
  %78 = vmatpush1.bf16.msra.mxu0 0
  %79 = vmatprep.subr.bf16.mxu0 0
  %80 = vmatpush1.bf16.msra.mxu0 0
  %81 = vmatprep.subr.bf16.mxu0 0
  %82 = vmatpush1.bf16.msra.mxu0 0
  %83 = vmatprep.subr.bf16.mxu0 0
  %84 = vmatpush1.bf16.msra.mxu0 0
  %85 = vmatprep.subr.bf16.mxu0 0
  %86 = vmatpush1.bf16.msra.mxu0 %v56
  %87 = vmatprep.subr.bf16.mxu0 0
  %88 = vmatpush2.bf16.msra.mxu0 0
  %89 = vmatprep.subr.bf16.mxu0 0
  %90 = vmatpush2.bf16.msra.mxu0 0
  %91 = vmatprep.subr.bf16.mxu0 0
  %92 = vmatpush2.bf16.msra.mxu0 0
  %93 = vmatprep.subr.bf16.mxu0 0
  %94 = vmatpush2.bf16.msra.mxu0 0
  %95 = vmatprep.subr.bf16.mxu0 0
  %96 = vmatpush2.bf16.msra.mxu0 0
  %97 = vmatprep.subr.bf16.mxu0 0
  %98 = vmatpush2.bf16.msra.mxu0 0
  %99 = vmatprep.subr.bf16.mxu0 0
  %100 = vmatpush2.bf16.msra.mxu0 0
  %101 = vmatprep.subr.bf16.mxu0 0
  %102 = vmatpush2.bf16.msra.mxu0 0
  %103 = vmatprep.mubr.bf16.mxu0 0
  %104 = vmatmul.mubr.bf16.gmra.mxu0 %v60
  %v105 = vpop.f32.mrf.mxu0
  %v106 = vadd.f32 %v30, %v105
  %v107 = vpop.f32.mrf.mxu0
  %v108 = vpop.f32.mrf.mxu0
  %v109 = vadd.f32 %v30, %v108
  %v110 = vpop.f32.mrf.mxu0
  %111 = vmatprep.mubr.bf16.mxu0 0
  %112 = vmatmul.mubr.bf16.gmra.mxu0 %v63
  %v113 = vpop.f32.mrf.mxu0
  %v114 = vadd.f32 %v30, %v113
  %v115 = vpop.f32.mrf.mxu0
  %v116 = vpop.f32.mrf.mxu0
  %v117 = vadd.f32 %v30, %v116
  %v118 = vpop.f32.mrf.mxu0
  %119 = vmatprep.mubr.bf16.mxu0 0
  %120 = vmatmul.mubr.bf16.gmra.mxu0 %v66
  %v121 = vpop.f32.mrf.mxu0
  %v122 = vadd.f32 %v30, %v121
  %v123 = vpop.f32.mrf.mxu0
  %v124 = vpop.f32.mrf.mxu0
  %v125 = vadd.f32 %v30, %v124
  %v126 = vpop.f32.mrf.mxu0
  %127 = vmatprep.mubr.bf16.mxu0 0
  %128 = vmatmul.mubr.bf16.gmra.mxu0 %v69
  %v129 = vpop.f32.mrf.mxu0
  %v130 = vadd.f32 %v30, %v129
  %v131 = vpop.f32.mrf.mxu0
  %v132 = vpop.f32.mrf.mxu0
  %v133 = vadd.f32 %v30, %v132
  %v134 = vpop.f32.mrf.mxu0
  %135 = vdwg.mxu0
  %v136 = vpack.c.bf16 %v109, %v106
  %v137 = vpack.c.bf16 %v117, %v114
  %v138 = vpack.c.bf16 %v125, %v122
  %v139 = vpack.c.bf16 %v133, %v130
  %v144 = vunpack.c.l.b16 %v136
  %v145 = vunpack.c.h.b16 %v136
  %v146 = vunpack.c.l.b16 %v137
  %v147 = vunpack.c.h.b16 %v137
  %v148 = vunpack.c.l.b16 %v138
  %v149 = vunpack.c.h.b16 %v138
  %v150 = vunpack.c.l.b16 %v139
  %v151 = vunpack.c.h.b16 %v139
  %v152 = vpack.c.b16 %v144, %v144
  %v153 = vpack.c.b16 %v145, %v145
  %v154 = vpack.c.b16 %v146, %v146
  %v155 = vpack.c.b16 %v147, %v147
  %v156 = vpack.c.b16 %v148, %v148
  %v157 = vpack.c.b16 %v149, %v149
  %v158 = vpack.c.b16 %v150, %v150
  %v159 = vpack.c.b16 %v151, %v151
  %168 = vst [vmem:[%s3] sm:$0xf] %v152
  %169 = vst [vmem:[%s3 + $0x4] sm:$0xf] %v153
  %170 = vst [vmem:[%s3 + $0x8] sm:$0xf] %v154
  %171 = vst [vmem:[%s3 + $0xc] sm:$0xf] %v155
  %172 = vst [vmem:[%s3 + $0x10] sm:$0xf] %v156
  %173 = vst [vmem:[%s3 + $0x14] sm:$0xf] %v157
  %174 = vst [vmem:[%s3 + $0x18] sm:$0xf] %v158
  %175 = vst [vmem:[%s3 + $0x1c] sm:$0xf] %v159
  // Predicated region
  $region14: #{simple_rnn_forward.3} parent=0 // pred_check
    _
  $region15: #{simple_rnn_forward.3} parent=0 // pred_check_branch
    %177 = sbr.rel (0) target = $region17
  $region16: #{simple_rnn_forward.3} parent=0 // pred_region
    _
  $region17: #{simple_rnn_forward.3} parent=0 // pred_fallthru
    _
  // Predicated region
  $region18: #{simple_rnn_forward.3} parent=0 // pred_check
    _
  $region19: #{simple_rnn_forward.3} parent=0 // pred_check_branch
    %179 = sbr.rel (0) target = $region21
  $region20: #{simple_rnn_forward.3} parent=0 // pred_region
    _
  $region21: #{simple_rnn_forward.3} parent=0 // pred_fallthru
    _

// kernel: simple_rnn_forward.4
$region0: #{simple_rnn_forward.4}
  #allocation0 [shape = 'u32[]', space=smem, size = 0x4, offset = 0x4, fixed_abs, tag = 'smem constant byte address 0x4 - core index']
  #allocation1 [shape = 'u32[144,128]{1,0:T(1,128)}', space=vmem, size = 0x12000, scoped, tag = 'internal scratch']
  #allocation2 [shape = 'f32[8,128]{1,0:T(8,128)}', space=vmem, size = 0x1000, scoped, tag = 'scratch operand']
  #allocation3 [shape = 'f32[8,8,128]{2,1,0:T(8,128)}', space=vmem, size = 0x8000, scoped, tag = 'scratch operand']
  %s0 = inlined_call_operand.vmem [shape: bf16[8,8,128], index: 0, kind: input, shape index: {}]
  %s1 = inlined_call_operand.vmem [shape: bf16[128,128], index: 1, kind: input, shape index: {}]
  %s2 = inlined_call_operand.vmem [shape: bf16[128,128], index: 2, kind: input, shape index: {}]
  %s3 = inlined_call_operand.vmem [shape: f32[1,128], index: 3, kind: input, shape index: {}]
  %s4 = inlined_call_operand.vmem [shape: bf16[8,8,128], index: 4, kind: output, shape index: {}]
  %s5 = sld [smem:[#allocation0]]
  $region30: #{simple_rnn_forward.4} parent=0
    _
  %s7 = ssub.s32 1, %s5
  %s8 = scalar_select 0, %s7, %s5
  // Predicated region
  $region2: #{simple_rnn_forward.4} parent=0 // pred_check
    _
  $region3: #{simple_rnn_forward.4} parent=0 // pred_check_branch
    %10 = sbr.rel (0) target = $region5
  $region4: #{simple_rnn_forward.4} parent=0 // pred_region
    _
  $region5: #{simple_rnn_forward.4} parent=0 // pred_fallthru
    _
  // Predicated region
  $region6: #{simple_rnn_forward.4} parent=0 // pred_check
    _
  $region7: #{simple_rnn_forward.4} parent=0 // pred_check_branch
    %12 = sbr.rel (0) target = $region9
  $region8: #{simple_rnn_forward.4} parent=0 // pred_region
    _
  $region9: #{simple_rnn_forward.4} parent=0 // pred_fallthru
    _
  // Predicated region
  $region10: #{simple_rnn_forward.4} parent=0 // pred_check
    _
  $region11: #{simple_rnn_forward.4} parent=0 // pred_check_branch
    %14 = sbr.rel (0) target = $region13
  $region12: #{simple_rnn_forward.4} parent=0 // pred_region
    _
  $region13: #{simple_rnn_forward.4} parent=0 // pred_fallthru
    _
  // Predicated region
  $region14: #{simple_rnn_forward.4} parent=0 // pred_check
    _
  $region15: #{simple_rnn_forward.4} parent=0 // pred_check_branch
    %16 = sbr.rel (0) target = $region17
  $region16: #{simple_rnn_forward.4} parent=0 // pred_region
    _
  $region17: #{simple_rnn_forward.4} parent=0 // pred_fallthru
    _
  %p18 = scmp.eq.s32.totalorder 0, 0
  // Predicated region
  $region18: #{simple_rnn_forward.4} parent=0 // pred_check
    %p19 = pneg %p18
  $region19: #{simple_rnn_forward.4} parent=0 // pred_check_branch
    %21 = sbr.rel (%p19) target = $region21
  $region20: #{simple_rnn_forward.4} parent=0 // pred_region
    %22 = vst [vmem:[#allocation2] sm:$0xff] 0.0
  $region21: #{simple_rnn_forward.4} parent=0 // pred_fallthru
    _
  %v23 = vld [vmem:[%s1] sm:$0xf]
  %v24 = vld [vmem:[%s1 + $0x4] sm:$0xf]
  %v25 = vld [vmem:[%s1 + $0x8] sm:$0xf]
  %v26 = vld [vmem:[%s1 + $0xc] sm:$0xf]
  %v27 = vld [vmem:[%s1 + $0x10] sm:$0xf]
  %v28 = vld [vmem:[%s1 + $0x14] sm:$0xf]
  %v29 = vld [vmem:[%s1 + $0x18] sm:$0xf]
  %v30 = vld [vmem:[%s1 + $0x1c] sm:$0xf]
  %v31 = vld [vmem:[%s1 + $0x20] sm:$0xf]
  %v32 = vld [vmem:[%s1 + $0x24] sm:$0xf]
  %v33 = vld [vmem:[%s1 + $0x28] sm:$0xf]
  %v34 = vld [vmem:[%s1 + $0x2c] sm:$0xf]
  %v35 = vld [vmem:[%s1 + $0x30] sm:$0xf]
  %v36 = vld [vmem:[%s1 + $0x34] sm:$0xf]
  %v37 = vld [vmem:[%s1 + $0x38] sm:$0xf]
  %v38 = vld [vmem:[%s1 + $0x3c] sm:$0xf]
  %v39 = vld [vmem:[#allocation2] sm:$0xff]
  %v40 = vld [vmem:[%s0] sm:$0xf]
  %v41 = vunpack.c.l.bf16 %v40
  %v42 = vpack.c.bf16 %v39, %v39
  %v59 = vunpack.c.l.b16 %v23
  %v60 = vunpack.c.l.b16 %v24
  %v61 = vunpack.c.l.b16 %v25
  %v62 = vunpack.c.l.b16 %v26
  %v63 = vunpack.c.l.b16 %v27
  %v64 = vunpack.c.l.b16 %v28
  %v65 = vunpack.c.l.b16 %v29
  %v66 = vunpack.c.l.b16 %v30
  %v67 = vunpack.c.l.b16 %v31
  %v68 = vunpack.c.l.b16 %v32
  %v69 = vunpack.c.l.b16 %v33
  %v70 = vunpack.c.l.b16 %v34
  %v71 = vunpack.c.l.b16 %v35
  %v72 = vunpack.c.l.b16 %v36
  %v73 = vunpack.c.l.b16 %v37
  %v74 = vunpack.c.l.b16 %v38
  %v75 = vpack.c.b16 %v60, %v59
  %v76 = vpack.c.b16 %v62, %v61
  %v77 = vpack.c.b16 %v64, %v63
  %v78 = vpack.c.b16 %v66, %v65
  %v79 = vpack.c.b16 %v68, %v67
  %v80 = vpack.c.b16 %v70, %v69
  %v81 = vpack.c.b16 %v72, %v71
  %v82 = vpack.c.b16 %v74, %v73
  %91 = vmatprep.subr.bf16.mxu0 0
  %92 = vmatpush1.bf16.msra.mxu0 %v82
  %93 = vmatprep.subr.bf16.mxu0 0
  %94 = vmatpush1.bf16.msra.mxu0 %v81
  %95 = vmatprep.subr.bf16.mxu0 0
  %96 = vmatpush1.bf16.msra.mxu0 %v80
  %97 = vmatprep.subr.bf16.mxu0 0
  %98 = vmatpush1.bf16.msra.mxu0 %v79
  %99 = vmatprep.subr.bf16.mxu0 0
  %100 = vmatpush1.bf16.msra.mxu0 %v78
  %101 = vmatprep.subr.bf16.mxu0 0
  %102 = vmatpush1.bf16.msra.mxu0 %v77
  %103 = vmatprep.subr.bf16.mxu0 0
  %104 = vmatpush1.bf16.msra.mxu0 %v76
  %105 = vmatprep.subr.bf16.mxu0 0
  %106 = vmatpush1.bf16.msra.mxu0 %v75
  %107 = vmatprep.subr.bf16.mxu0 0
  %108 = vmatpush2.bf16.msra.mxu0 0
  %109 = vmatprep.subr.bf16.mxu0 0
  %110 = vmatpush2.bf16.msra.mxu0 0
  %111 = vmatprep.subr.bf16.mxu0 0
  %112 = vmatpush2.bf16.msra.mxu0 0
  %113 = vmatprep.subr.bf16.mxu0 0
  %114 = vmatpush2.bf16.msra.mxu0 0
  %115 = vmatprep.subr.bf16.mxu0 0
  %116 = vmatpush2.bf16.msra.mxu0 0
  %117 = vmatprep.subr.bf16.mxu0 0
  %118 = vmatpush2.bf16.msra.mxu0 0
  %119 = vmatprep.subr.bf16.mxu0 0
  %120 = vmatpush2.bf16.msra.mxu0 0
  %121 = vmatprep.subr.bf16.mxu0 0
  %122 = vmatpush2.bf16.msra.mxu0 0
  %123 = vmatprep.mubr.bf16.mxu0 0
  %124 = vmatmul.mubr.bf16.gmra.mxu0 %v42
  %v125 = vpop.f32.mrf.mxu0
  %v126 = vadd.f32 0.0, %v125
  %v127 = vpop.f32.mrf.mxu0
  %v128 = vpop.f32.mrf.mxu0
  %v129 = vpop.f32.mrf.mxu0
  %130 = vdwg.mxu0
  %v131 = vadd.f32 %v41, %v126
  %v132 = vtanh.pop %v131
  %133 = vst [vmem:[#allocation3] sm:$0xff] %v132
  %s134 = scalar_lea.vmem %s0, 4
  %v135 = vld [vmem:[%s134] sm:$0xf]
  %v136 = vunpack.c.l.bf16 %v135
  %v137 = vpack.c.bf16 %v132, %v132
  %138 = vmatprep.subr.bf16.mxu0 0
  %139 = vmatpush1.bf16.msra.mxu0 %v82
  %140 = vmatprep.subr.bf16.mxu0 0
  %141 = vmatpush1.bf16.msra.mxu0 %v81
  %142 = vmatprep.subr.bf16.mxu0 0
  %143 = vmatpush1.bf16.msra.mxu0 %v80
  %144 = vmatprep.subr.bf16.mxu0 0
  %145 = vmatpush1.bf16.msra.mxu0 %v79
  %146 = vmatprep.subr.bf16.mxu0 0
  %147 = vmatpush1.bf16.msra.mxu0 %v78
  %148 = vmatprep.subr.bf16.mxu0 0
  %149 = vmatpush1.bf16.msra.mxu0 %v77
  %150 = vmatprep.subr.bf16.mxu0 0
  %151 = vmatpush1.bf16.msra.mxu0 %v76
  %152 = vmatprep.subr.bf16.mxu0 0
  %153 = vmatpush1.bf16.msra.mxu0 %v75
  %154 = vmatprep.subr.bf16.mxu0 0
  %155 = vmatpush2.bf16.msra.mxu0 0
  %156 = vmatprep.subr.bf16.mxu0 0
  %157 = vmatpush2.bf16.msra.mxu0 0
  %158 = vmatprep.subr.bf16.mxu0 0
  %159 = vmatpush2.bf16.msra.mxu0 0
  %160 = vmatprep.subr.bf16.mxu0 0
  %161 = vmatpush2.bf16.msra.mxu0 0
  %162 = vmatprep.subr.bf16.mxu0 0
  %163 = vmatpush2.bf16.msra.mxu0 0
  %164 = vmatprep.subr.bf16.mxu0 0
  %165 = vmatpush2.bf16.msra.mxu0 0
  %166 = vmatprep.subr.bf16.mxu0 0
  %167 = vmatpush2.bf16.msra.mxu0 0
  %168 = vmatprep.subr.bf16.mxu0 0
  %169 = vmatpush2.bf16.msra.mxu0 0
  %170 = vmatprep.mubr.bf16.mxu0 0
  %171 = vmatmul.mubr.bf16.gmra.mxu0 %v137
  %v172 = vpop.f32.mrf.mxu0
  %v173 = vadd.f32 0.0, %v172
  %v174 = vpop.f32.mrf.mxu0
  %v175 = vpop.f32.mrf.mxu0
  %v176 = vpop.f32.mrf.mxu0
  %177 = vdwg.mxu0
  %v178 = vadd.f32 %v136, %v173
  %v179 = vtanh.pop %v178
  %s180 = scalar_lea.vmem [#allocation3], 8
  %181 = vst [vmem:[%s180] sm:$0xff] %v179
  %s182 = scalar_lea.vmem %s0, 8
  %v183 = vld [vmem:[%s182] sm:$0xf]
  %v184 = vunpack.c.l.bf16 %v183
  %v185 = vpack.c.bf16 %v179, %v179
  %186 = vmatprep.subr.bf16.mxu0 0
  %187 = vmatpush1.bf16.msra.mxu0 %v82
  %188 = vmatprep.subr.bf16.mxu0 0
  %189 = vmatpush1.bf16.msra.mxu0 %v81
  %190 = vmatprep.subr.bf16.mxu0 0
  %191 = vmatpush1.bf16.msra.mxu0 %v80
  %192 = vmatprep.subr.bf16.mxu0 0
  %193 = vmatpush1.bf16.msra.mxu0 %v79
  %194 = vmatprep.subr.bf16.mxu0 0
  %195 = vmatpush1.bf16.msra.mxu0 %v78
  %196 = vmatprep.subr.bf16.mxu0 0
  %197 = vmatpush1.bf16.msra.mxu0 %v77
  %198 = vmatprep.subr.bf16.mxu0 0
  %199 = vmatpush1.bf16.msra.mxu0 %v76
  %200 = vmatprep.subr.bf16.mxu0 0
  %201 = vmatpush1.bf16.msra.mxu0 %v75
  %202 = vmatprep.subr.bf16.mxu0 0
  %203 = vmatpush2.bf16.msra.mxu0 0
  %204 = vmatprep.subr.bf16.mxu0 0
  %205 = vmatpush2.bf16.msra.mxu0 0
  %206 = vmatprep.subr.bf16.mxu0 0
  %207 = vmatpush2.bf16.msra.mxu0 0
  %208 = vmatprep.subr.bf16.mxu0 0
  %209 = vmatpush2.bf16.msra.mxu0 0
  %210 = vmatprep.subr.bf16.mxu0 0
  %211 = vmatpush2.bf16.msra.mxu0 0
  %212 = vmatprep.subr.bf16.mxu0 0
  %213 = vmatpush2.bf16.msra.mxu0 0
  %214 = vmatprep.subr.bf16.mxu0 0
  %215 = vmatpush2.bf16.msra.mxu0 0
  %216 = vmatprep.subr.bf16.mxu0 0
  %217 = vmatpush2.bf16.msra.mxu0 0
  %218 = vmatprep.mubr.bf16.mxu0 0
  %219 = vmatmul.mubr.bf16.gmra.mxu0 %v185
  %v220 = vpop.f32.mrf.mxu0
  %v221 = vadd.f32 0.0, %v220
  %v222 = vpop.f32.mrf.mxu0
  %v223 = vpop.f32.mrf.mxu0
  %v224 = vpop.f32.mrf.mxu0
  %225 = vdwg.mxu0
  %v226 = vadd.f32 %v184, %v221
  %v227 = vtanh.pop %v226
  %s228 = scalar_lea.vmem [#allocation3], 16
  %229 = vst [vmem:[%s228] sm:$0xff] %v227
  %s230 = scalar_lea.vmem %s0, 12
  %v231 = vld [vmem:[%s230] sm:$0xf]
  %v232 = vunpack.c.l.bf16 %v231
  %v233 = vpack.c.bf16 %v227, %v227
  %234 = vmatprep.subr.bf16.mxu0 0
  %235 = vmatpush1.bf16.msra.mxu0 %v82
  %236 = vmatprep.subr.bf16.mxu0 0
  %237 = vmatpush1.bf16.msra.mxu0 %v81
  %238 = vmatprep.subr.bf16.mxu0 0
  %239 = vmatpush1.bf16.msra.mxu0 %v80
  %240 = vmatprep.subr.bf16.mxu0 0
  %241 = vmatpush1.bf16.msra.mxu0 %v79
  %242 = vmatprep.subr.bf16.mxu0 0
  %243 = vmatpush1.bf16.msra.mxu0 %v78
  %244 = vmatprep.subr.bf16.mxu0 0
  %245 = vmatpush1.bf16.msra.mxu0 %v77
  %246 = vmatprep.subr.bf16.mxu0 0
  %247 = vmatpush1.bf16.msra.mxu0 %v76
  %248 = vmatprep.subr.bf16.mxu0 0
  %249 = vmatpush1.bf16.msra.mxu0 %v75
  %250 = vmatprep.subr.bf16.mxu0 0
  %251 = vmatpush2.bf16.msra.mxu0 0
  %252 = vmatprep.subr.bf16.mxu0 0
  %253 = vmatpush2.bf16.msra.mxu0 0
  %254 = vmatprep.subr.bf16.mxu0 0
  %255 = vmatpush2.bf16.msra.mxu0 0
  %256 = vmatprep.subr.bf16.mxu0 0
  %257 = vmatpush2.bf16.msra.mxu0 0
  %258 = vmatprep.subr.bf16.mxu0 0
  %259 = vmatpush2.bf16.msra.mxu0 0
  %260 = vmatprep.subr.bf16.mxu0 0
  %261 = vmatpush2.bf16.msra.mxu0 0
  %262 = vmatprep.subr.bf16.mxu0 0
  %263 = vmatpush2.bf16.msra.mxu0 0
  %264 = vmatprep.subr.bf16.mxu0 0
  %265 = vmatpush2.bf16.msra.mxu0 0
  %266 = vmatprep.mubr.bf16.mxu0 0
  %267 = vmatmul.mubr.bf16.gmra.mxu0 %v233
  %v268 = vpop.f32.mrf.mxu0
  %v269 = vadd.f32 0.0, %v268
  %v270 = vpop.f32.mrf.mxu0
  %v271 = vpop.f32.mrf.mxu0
  %v272 = vpop.f32.mrf.mxu0
  %273 = vdwg.mxu0
  %v274 = vadd.f32 %v232, %v269
  %v275 = vtanh.pop %v274
  %s276 = scalar_lea.vmem [#allocation3], 24
  %277 = vst [vmem:[%s276] sm:$0xff] %v275
  %s278 = scalar_lea.vmem %s0, 16
  %v279 = vld [vmem:[%s278] sm:$0xf]
  %v280 = vunpack.c.l.bf16 %v279
  %v281 = vpack.c.bf16 %v275, %v275
  %282 = vmatprep.subr.bf16.mxu0 0
  %283 = vmatpush1.bf16.msra.mxu0 %v82
  %284 = vmatprep.subr.bf16.mxu0 0
  %285 = vmatpush1.bf16.msra.mxu0 %v81
  %286 = vmatprep.subr.bf16.mxu0 0
  %287 = vmatpush1.bf16.msra.mxu0 %v80
  %288 = vmatprep.subr.bf16.mxu0 0
  %289 = vmatpush1.bf16.msra.mxu0 %v79
  %290 = vmatprep.subr.bf16.mxu0 0
  %291 = vmatpush1.bf16.msra.mxu0 %v78
  %292 = vmatprep.subr.bf16.mxu0 0
  %293 = vmatpush1.bf16.msra.mxu0 %v77
  %294 = vmatprep.subr.bf16.mxu0 0
  %295 = vmatpush1.bf16.msra.mxu0 %v76
  %296 = vmatprep.subr.bf16.mxu0 0
  %297 = vmatpush1.bf16.msra.mxu0 %v75
  %298 = vmatprep.subr.bf16.mxu0 0
  %299 = vmatpush2.bf16.msra.mxu0 0
  %300 = vmatprep.subr.bf16.mxu0 0
  %301 = vmatpush2.bf16.msra.mxu0 0
  %302 = vmatprep.subr.bf16.mxu0 0
  %303 = vmatpush2.bf16.msra.mxu0 0
  %304 = vmatprep.subr.bf16.mxu0 0
  %305 = vmatpush2.bf16.msra.mxu0 0
  %306 = vmatprep.subr.bf16.mxu0 0
  %307 = vmatpush2.bf16.msra.mxu0 0
  %308 = vmatprep.subr.bf16.mxu0 0
  %309 = vmatpush2.bf16.msra.mxu0 0
  %310 = vmatprep.subr.bf16.mxu0 0
  %311 = vmatpush2.bf16.msra.mxu0 0
  %312 = vmatprep.subr.bf16.mxu0 0
  %313 = vmatpush2.bf16.msra.mxu0 0
  %314 = vmatprep.mubr.bf16.mxu0 0
  %315 = vmatmul.mubr.bf16.gmra.mxu0 %v281
  %v316 = vpop.f32.mrf.mxu0
  %v317 = vadd.f32 0.0, %v316
  %v318 = vpop.f32.mrf.mxu0
  %v319 = vpop.f32.mrf.mxu0
  %v320 = vpop.f32.mrf.mxu0
  %321 = vdwg.mxu0
  %v322 = vadd.f32 %v280, %v317
  %v323 = vtanh.pop %v322
  %s324 = scalar_lea.vmem [#allocation3], 32
  %325 = vst [vmem:[%s324] sm:$0xff] %v323
  %s326 = scalar_lea.vmem %s0, 20
  %v327 = vld [vmem:[%s326] sm:$0xf]
  %v328 = vunpack.c.l.bf16 %v327
  %v329 = vpack.c.bf16 %v323, %v323
  %330 = vmatprep.subr.bf16.mxu0 0
  %331 = vmatpush1.bf16.msra.mxu0 %v82
  %332 = vmatprep.subr.bf16.mxu0 0
  %333 = vmatpush1.bf16.msra.mxu0 %v81
  %334 = vmatprep.subr.bf16.mxu0 0
  %335 = vmatpush1.bf16.msra.mxu0 %v80
  %336 = vmatprep.subr.bf16.mxu0 0
  %337 = vmatpush1.bf16.msra.mxu0 %v79
  %338 = vmatprep.subr.bf16.mxu0 0
  %339 = vmatpush1.bf16.msra.mxu0 %v78
  %340 = vmatprep.subr.bf16.mxu0 0
  %341 = vmatpush1.bf16.msra.mxu0 %v77
  %342 = vmatprep.subr.bf16.mxu0 0
  %343 = vmatpush1.bf16.msra.mxu0 %v76
  %344 = vmatprep.subr.bf16.mxu0 0
  %345 = vmatpush1.bf16.msra.mxu0 %v75
  %346 = vmatprep.subr.bf16.mxu0 0
  %347 = vmatpush2.bf16.msra.mxu0 0
  %348 = vmatprep.subr.bf16.mxu0 0
  %349 = vmatpush2.bf16.msra.mxu0 0
  %350 = vmatprep.subr.bf16.mxu0 0
  %351 = vmatpush2.bf16.msra.mxu0 0
  %352 = vmatprep.subr.bf16.mxu0 0
  %353 = vmatpush2.bf16.msra.mxu0 0
  %354 = vmatprep.subr.bf16.mxu0 0
  %355 = vmatpush2.bf16.msra.mxu0 0
  %356 = vmatprep.subr.bf16.mxu0 0
  %357 = vmatpush2.bf16.msra.mxu0 0
  %358 = vmatprep.subr.bf16.mxu0 0
  %359 = vmatpush2.bf16.msra.mxu0 0
  %360 = vmatprep.subr.bf16.mxu0 0
  %361 = vmatpush2.bf16.msra.mxu0 0
  %362 = vmatprep.mubr.bf16.mxu0 0
  %363 = vmatmul.mubr.bf16.gmra.mxu0 %v329
  %v364 = vpop.f32.mrf.mxu0
  %v365 = vadd.f32 0.0, %v364
  %v366 = vpop.f32.mrf.mxu0
  %v367 = vpop.f32.mrf.mxu0
  %v368 = vpop.f32.mrf.mxu0
  %369 = vdwg.mxu0
  %v370 = vadd.f32 %v328, %v365
  %v371 = vtanh.pop %v370
  %s372 = scalar_lea.vmem [#allocation3], 40
  %373 = vst [vmem:[%s372] sm:$0xff] %v371
  %s374 = scalar_lea.vmem %s0, 24
  %v375 = vld [vmem:[%s374] sm:$0xf]
  %v376 = vunpack.c.l.bf16 %v375
  %v377 = vpack.c.bf16 %v371, %v371
  %378 = vmatprep.subr.bf16.mxu0 0
  %379 = vmatpush1.bf16.msra.mxu0 %v82
  %380 = vmatprep.subr.bf16.mxu0 0
  %381 = vmatpush1.bf16.msra.mxu0 %v81
  %382 = vmatprep.subr.bf16.mxu0 0
  %383 = vmatpush1.bf16.msra.mxu0 %v80
  %384 = vmatprep.subr.bf16.mxu0 0
  %385 = vmatpush1.bf16.msra.mxu0 %v79
  %386 = vmatprep.subr.bf16.mxu0 0
  %387 = vmatpush1.bf16.msra.mxu0 %v78
  %388 = vmatprep.subr.bf16.mxu0 0
  %389 = vmatpush1.bf16.msra.mxu0 %v77
  %390 = vmatprep.subr.bf16.mxu0 0
  %391 = vmatpush1.bf16.msra.mxu0 %v76
  %392 = vmatprep.subr.bf16.mxu0 0
  %393 = vmatpush1.bf16.msra.mxu0 %v75
  %394 = vmatprep.subr.bf16.mxu0 0
  %395 = vmatpush2.bf16.msra.mxu0 0
  %396 = vmatprep.subr.bf16.mxu0 0
  %397 = vmatpush2.bf16.msra.mxu0 0
  %398 = vmatprep.subr.bf16.mxu0 0
  %399 = vmatpush2.bf16.msra.mxu0 0
  %400 = vmatprep.subr.bf16.mxu0 0
  %401 = vmatpush2.bf16.msra.mxu0 0
  %402 = vmatprep.subr.bf16.mxu0 0
  %403 = vmatpush2.bf16.msra.mxu0 0
  %404 = vmatprep.subr.bf16.mxu0 0
  %405 = vmatpush2.bf16.msra.mxu0 0
  %406 = vmatprep.subr.bf16.mxu0 0
  %407 = vmatpush2.bf16.msra.mxu0 0
  %408 = vmatprep.subr.bf16.mxu0 0
  %409 = vmatpush2.bf16.msra.mxu0 0
  %410 = vmatprep.mubr.bf16.mxu0 0
  %411 = vmatmul.mubr.bf16.gmra.mxu0 %v377
  %v412 = vpop.f32.mrf.mxu0
  %v413 = vadd.f32 0.0, %v412
  %v414 = vpop.f32.mrf.mxu0
  %v415 = vpop.f32.mrf.mxu0
  %v416 = vpop.f32.mrf.mxu0
  %417 = vdwg.mxu0
  %v418 = vadd.f32 %v376, %v413
  %v419 = vtanh.pop %v418
  %s420 = scalar_lea.vmem [#allocation3], 48
  %421 = vst [vmem:[%s420] sm:$0xff] %v419
  %s422 = scalar_lea.vmem %s0, 28
  %v423 = vld [vmem:[%s422] sm:$0xf]
  %v424 = vunpack.c.l.bf16 %v423
  %v425 = vpack.c.bf16 %v419, %v419
  %426 = vmatprep.subr.bf16.mxu0 0
  %427 = vmatpush1.bf16.msra.mxu0 %v82
  %428 = vmatprep.subr.bf16.mxu0 0
  %429 = vmatpush1.bf16.msra.mxu0 %v81
  %430 = vmatprep.subr.bf16.mxu0 0
  %431 = vmatpush1.bf16.msra.mxu0 %v80
  %432 = vmatprep.subr.bf16.mxu0 0
  %433 = vmatpush1.bf16.msra.mxu0 %v79
  %434 = vmatprep.subr.bf16.mxu0 0
  %435 = vmatpush1.bf16.msra.mxu0 %v78
  %436 = vmatprep.subr.bf16.mxu0 0
  %437 = vmatpush1.bf16.msra.mxu0 %v77
  %438 = vmatprep.subr.bf16.mxu0 0
  %439 = vmatpush1.bf16.msra.mxu0 %v76
  %440 = vmatprep.subr.bf16.mxu0 0
  %441 = vmatpush1.bf16.msra.mxu0 %v75
  %442 = vmatprep.subr.bf16.mxu0 0
  %443 = vmatpush2.bf16.msra.mxu0 0
  %444 = vmatprep.subr.bf16.mxu0 0
  %445 = vmatpush2.bf16.msra.mxu0 0
  %446 = vmatprep.subr.bf16.mxu0 0
  %447 = vmatpush2.bf16.msra.mxu0 0
  %448 = vmatprep.subr.bf16.mxu0 0
  %449 = vmatpush2.bf16.msra.mxu0 0
  %450 = vmatprep.subr.bf16.mxu0 0
  %451 = vmatpush2.bf16.msra.mxu0 0
  %452 = vmatprep.subr.bf16.mxu0 0
  %453 = vmatpush2.bf16.msra.mxu0 0
  %454 = vmatprep.subr.bf16.mxu0 0
  %455 = vmatpush2.bf16.msra.mxu0 0
  %456 = vmatprep.subr.bf16.mxu0 0
  %457 = vmatpush2.bf16.msra.mxu0 0
  %458 = vmatprep.mubr.bf16.mxu0 0
  %459 = vmatmul.mubr.bf16.gmra.mxu0 %v425
  %v460 = vpop.f32.mrf.mxu0
  %v461 = vadd.f32 0.0, %v460
  %v462 = vpop.f32.mrf.mxu0
  %v463 = vpop.f32.mrf.mxu0
  %v464 = vpop.f32.mrf.mxu0
  %465 = vdwg.mxu0
  %v466 = vadd.f32 %v424, %v461
  %v467 = vtanh.pop %v466
  %s468 = scalar_lea.vmem [#allocation3], 56
  %469 = vst [vmem:[%s468] sm:$0xff] %v467
  %470 = vst [vmem:[#allocation2] sm:$0xff] %v467
  %v471 = vld [vmem:[#allocation3] sm:$0xff]
  %v472 = vld [vmem:[#allocation3 + $0x8] sm:$0xff]
  %v473 = vld [vmem:[#allocation3 + $0x10] sm:$0xff]
  %v474 = vld [vmem:[#allocation3 + $0x18] sm:$0xff]
  %v475 = vld [vmem:[#allocation3 + $0x20] sm:$0xff]
  %v476 = vld [vmem:[#allocation3 + $0x28] sm:$0xff]
  %v477 = vld [vmem:[#allocation3 + $0x30] sm:$0xff]
  %v478 = vld [vmem:[#allocation3 + $0x38] sm:$0xff]
  %v479 = vpack.c.bf16 %v472, %v471
  %v480 = vpack.c.bf16 %v474, %v473
  %v481 = vpack.c.bf16 %v476, %v475
  %v482 = vpack.c.bf16 %v478, %v477
  %v483 = vld [vmem:[%s2] sm:$0xf]
  %v484 = vld [vmem:[%s2 + $0x4] sm:$0xf]
  %v485 = vld [vmem:[%s2 + $0x8] sm:$0xf]
  %v486 = vld [vmem:[%s2 + $0xc] sm:$0xf]
  %v487 = vld [vmem:[%s2 + $0x10] sm:$0xf]
  %v488 = vld [vmem:[%s2 + $0x14] sm:$0xf]
  %v489 = vld [vmem:[%s2 + $0x18] sm:$0xf]
  %v490 = vld [vmem:[%s2 + $0x1c] sm:$0xf]
  %v491 = vld [vmem:[%s2 + $0x20] sm:$0xf]
  %v492 = vld [vmem:[%s2 + $0x24] sm:$0xf]
  %v493 = vld [vmem:[%s2 + $0x28] sm:$0xf]
  %v494 = vld [vmem:[%s2 + $0x2c] sm:$0xf]
  %v495 = vld [vmem:[%s2 + $0x30] sm:$0xf]
  %v496 = vld [vmem:[%s2 + $0x34] sm:$0xf]
  %v497 = vld [vmem:[%s2 + $0x38] sm:$0xf]
  %v498 = vld [vmem:[%s2 + $0x3c] sm:$0xf]
  %v499 = vld [vmem:[%s3] sm:$0x1]
  %v501 = vlaneseq
  %v502 = vshrl.u32 %v501, 7
  %v503 = vsub.s32 0, %v502
  %v504 = vrot.slane %v499, %v503
  %v522 = vunpack.c.l.b16 %v483
  %v523 = vunpack.c.l.b16 %v484
  %v524 = vunpack.c.l.b16 %v485
  %v525 = vunpack.c.l.b16 %v486
  %v526 = vunpack.c.l.b16 %v487
  %v527 = vunpack.c.l.b16 %v488
  %v528 = vunpack.c.l.b16 %v489
  %v529 = vunpack.c.l.b16 %v490
  %v530 = vunpack.c.l.b16 %v491
  %v531 = vunpack.c.l.b16 %v492
  %v532 = vunpack.c.l.b16 %v493
  %v533 = vunpack.c.l.b16 %v494
  %v534 = vunpack.c.l.b16 %v495
  %v535 = vunpack.c.l.b16 %v496
  %v536 = vunpack.c.l.b16 %v497
  %v537 = vunpack.c.l.b16 %v498
  %v538 = vpack.c.b16 %v523, %v522
  %v539 = vpack.c.b16 %v525, %v524
  %v540 = vpack.c.b16 %v527, %v526
  %v541 = vpack.c.b16 %v529, %v528
  %v542 = vpack.c.b16 %v531, %v530
  %v543 = vpack.c.b16 %v533, %v532
  %v544 = vpack.c.b16 %v535, %v534
  %v545 = vpack.c.b16 %v537, %v536
  %554 = vmatprep.subr.bf16.mxu0 0
  %555 = vmatpush1.bf16.msra.mxu0 %v545
  %556 = vmatprep.subr.bf16.mxu0 0
  %557 = vmatpush1.bf16.msra.mxu0 %v544
  %558 = vmatprep.subr.bf16.mxu0 0
  %559 = vmatpush1.bf16.msra.mxu0 %v543
  %560 = vmatprep.subr.bf16.mxu0 0
  %561 = vmatpush1.bf16.msra.mxu0 %v542
  %562 = vmatprep.subr.bf16.mxu0 0
  %563 = vmatpush1.bf16.msra.mxu0 %v541
  %564 = vmatprep.subr.bf16.mxu0 0
  %565 = vmatpush1.bf16.msra.mxu0 %v540
  %566 = vmatprep.subr.bf16.mxu0 0
  %567 = vmatpush1.bf16.msra.mxu0 %v539
  %568 = vmatprep.subr.bf16.mxu0 0
  %569 = vmatpush1.bf16.msra.mxu0 %v538
  %570 = vmatprep.subr.bf16.mxu0 0
  %571 = vmatpush2.bf16.msra.mxu0 0
  %572 = vmatprep.subr.bf16.mxu0 0
  %573 = vmatpush2.bf16.msra.mxu0 0
  %574 = vmatprep.subr.bf16.mxu0 0
  %575 = vmatpush2.bf16.msra.mxu0 0
  %576 = vmatprep.subr.bf16.mxu0 0
  %577 = vmatpush2.bf16.msra.mxu0 0
  %578 = vmatprep.subr.bf16.mxu0 0
  %579 = vmatpush2.bf16.msra.mxu0 0
  %580 = vmatprep.subr.bf16.mxu0 0
  %581 = vmatpush2.bf16.msra.mxu0 0
  %582 = vmatprep.subr.bf16.mxu0 0
  %583 = vmatpush2.bf16.msra.mxu0 0
  %584 = vmatprep.subr.bf16.mxu0 0
  %585 = vmatpush2.bf16.msra.mxu0 0
  %586 = vmatprep.mubr.bf16.mxu0 0
  %587 = vmatmul.mubr.bf16.gmra.mxu0 %v479
  %v588 = vpop.f32.mrf.mxu0
  %v589 = vadd.f32 %v504, %v588
  %v590 = vpop.f32.mrf.mxu0
  %v591 = vpop.f32.mrf.mxu0
  %v592 = vadd.f32 %v504, %v591
  %v593 = vpop.f32.mrf.mxu0
  %594 = vmatprep.mubr.bf16.mxu0 0
  %595 = vmatmul.mubr.bf16.gmra.mxu0 %v480
  %v596 = vpop.f32.mrf.mxu0
  %v597 = vadd.f32 %v504, %v596
  %v598 = vpop.f32.mrf.mxu0
  %v599 = vpop.f32.mrf.mxu0
  %v600 = vadd.f32 %v504, %v599
  %v601 = vpop.f32.mrf.mxu0
  %602 = vmatprep.mubr.bf16.mxu0 0
  %603 = vmatmul.mubr.bf16.gmra.mxu0 %v481
  %v604 = vpop.f32.mrf.mxu0
  %v605 = vadd.f32 %v504, %v604
  %v606 = vpop.f32.mrf.mxu0
  %v607 = vpop.f32.mrf.mxu0
  %v608 = vadd.f32 %v504, %v607
  %v609 = vpop.f32.mrf.mxu0
  %610 = vmatprep.mubr.bf16.mxu0 0
  %611 = vmatmul.mubr.bf16.gmra.mxu0 %v482
  %v612 = vpop.f32.mrf.mxu0
  %v613 = vadd.f32 %v504, %v612
  %v614 = vpop.f32.mrf.mxu0
  %v615 = vpop.f32.mrf.mxu0
  %v616 = vadd.f32 %v504, %v615
  %v617 = vpop.f32.mrf.mxu0
  %618 = vdwg.mxu0
  %v619 = vpack.c.bf16 %v589, %v589
  %v620 = vpack.c.bf16 %v592, %v592
  %v621 = vpack.c.bf16 %v597, %v597
  %v622 = vpack.c.bf16 %v600, %v600
  %v623 = vpack.c.bf16 %v605, %v605
  %v624 = vpack.c.bf16 %v608, %v608
  %v625 = vpack.c.bf16 %v613, %v613
  %v626 = vpack.c.bf16 %v616, %v616
  %627 = vst [vmem:[%s4] sm:$0xf] %v619
  %628 = vst [vmem:[%s4 + $0x4] sm:$0xf] %v620
  %629 = vst [vmem:[%s4 + $0x8] sm:$0xf] %v621
  %630 = vst [vmem:[%s4 + $0xc] sm:$0xf] %v622
  %631 = vst [vmem:[%s4 + $0x10] sm:$0xf] %v623
  %632 = vst [vmem:[%s4 + $0x14] sm:$0xf] %v624
  %633 = vst [vmem:[%s4 + $0x18] sm:$0xf] %v625
  %634 = vst [vmem:[%s4 + $0x1c] sm:$0xf] %v626
  // Predicated region
  $region22: #{simple_rnn_forward.4} parent=0 // pred_check
    _
  $region23: #{simple_rnn_forward.4} parent=0 // pred_check_branch
    %636 = sbr.rel (0) target = $region25
  $region24: #{simple_rnn_forward.4} parent=0 // pred_region
    _
  $region25: #{simple_rnn_forward.4} parent=0 // pred_fallthru
    _
  // Predicated region
  $region26: #{simple_rnn_forward.4} parent=0 // pred_check
    _
  $region27: #{simple_rnn_forward.4} parent=0 // pred_check_branch
    %638 = sbr.rel (0) target = $region29
  $region28: #{simple_rnn_forward.4} parent=0 // pred_region
    _
  $region29: #{simple_rnn_forward.4} parent=0 // pred_fallthru
    _

// kernel: simple_rnn_forward.5
$region0: #{simple_rnn_forward.5}
  #allocation0 [shape = 'u32[]', space=smem, size = 0x4, offset = 0x4, fixed_abs, tag = 'smem constant byte address 0x4 - core index']
  #allocation1 [shape = 'u32[144,128]{1,0:T(1,128)}', space=vmem, size = 0x12000, scoped, tag = 'internal scratch']
  #allocation2 [shape = 'f32[8,128]{1,0:T(8,128)}', space=vmem, size = 0x1000, scoped, tag = 'scratch operand']
  %s0 = inlined_call_operand.vmem [shape: bf16[8,8,128], index: 0, kind: input, shape index: {}]
  %s1 = inlined_call_operand.vmem [shape: bf16[128,128], index: 1, kind: input, shape index: {}]
  %s2 = inlined_call_operand.vmem [shape: bf16[128,128], index: 2, kind: input, shape index: {}]
  %s3 = inlined_call_operand.vmem [shape: f32[1,128], index: 3, kind: input, shape index: {}]
  %s4 = inlined_call_operand.vmem [shape: f32[8,128], index: 4, kind: output, shape index: {}]
  %s5 = sld [smem:[#allocation0]]
  $region34: #{simple_rnn_forward.5} parent=0
    _
  %s7 = ssub.s32 1, %s5
  %s8 = scalar_select 0, %s7, %s5
  // Predicated region
  $region2: #{simple_rnn_forward.5} parent=0 // pred_check
    _
  $region3: #{simple_rnn_forward.5} parent=0 // pred_check_branch
    %10 = sbr.rel (0) target = $region5
  $region4: #{simple_rnn_forward.5} parent=0 // pred_region
    _
  $region5: #{simple_rnn_forward.5} parent=0 // pred_fallthru
    _
  // Predicated region
  $region6: #{simple_rnn_forward.5} parent=0 // pred_check
    _
  $region7: #{simple_rnn_forward.5} parent=0 // pred_check_branch
    %12 = sbr.rel (0) target = $region9
  $region8: #{simple_rnn_forward.5} parent=0 // pred_region
    _
  $region9: #{simple_rnn_forward.5} parent=0 // pred_fallthru
    _
  // Predicated region
  $region10: #{simple_rnn_forward.5} parent=0 // pred_check
    _
  $region11: #{simple_rnn_forward.5} parent=0 // pred_check_branch
    %14 = sbr.rel (0) target = $region13
  $region12: #{simple_rnn_forward.5} parent=0 // pred_region
    _
  $region13: #{simple_rnn_forward.5} parent=0 // pred_fallthru
    _
  // Predicated region
  $region14: #{simple_rnn_forward.5} parent=0 // pred_check
    _
  $region15: #{simple_rnn_forward.5} parent=0 // pred_check_branch
    %16 = sbr.rel (0) target = $region17
  $region16: #{simple_rnn_forward.5} parent=0 // pred_region
    _
  $region17: #{simple_rnn_forward.5} parent=0 // pred_fallthru
    _
  %p18 = scmp.eq.s32.totalorder 0, 0
  // Predicated region
  $region18: #{simple_rnn_forward.5} parent=0 // pred_check
    %p19 = pneg %p18
  $region19: #{simple_rnn_forward.5} parent=0 // pred_check_branch
    %21 = sbr.rel (%p19) target = $region21
  $region20: #{simple_rnn_forward.5} parent=0 // pred_region
    %22 = vst [vmem:[#allocation2] sm:$0xff] 0.0
  $region21: #{simple_rnn_forward.5} parent=0 // pred_fallthru
    _
  %v23 = vld [vmem:[%s1] sm:$0xf]
  %v24 = vld [vmem:[%s1 + $0x4] sm:$0xf]
  %v25 = vld [vmem:[%s1 + $0x8] sm:$0xf]
  %v26 = vld [vmem:[%s1 + $0xc] sm:$0xf]
  %v27 = vld [vmem:[%s1 + $0x10] sm:$0xf]
  %v28 = vld [vmem:[%s1 + $0x14] sm:$0xf]
  %v29 = vld [vmem:[%s1 + $0x18] sm:$0xf]
  %v30 = vld [vmem:[%s1 + $0x1c] sm:$0xf]
  %v31 = vld [vmem:[%s1 + $0x20] sm:$0xf]
  %v32 = vld [vmem:[%s1 + $0x24] sm:$0xf]
  %v33 = vld [vmem:[%s1 + $0x28] sm:$0xf]
  %v34 = vld [vmem:[%s1 + $0x2c] sm:$0xf]
  %v35 = vld [vmem:[%s1 + $0x30] sm:$0xf]
  %v36 = vld [vmem:[%s1 + $0x34] sm:$0xf]
  %v37 = vld [vmem:[%s1 + $0x38] sm:$0xf]
  %v38 = vld [vmem:[%s1 + $0x3c] sm:$0xf]
  %v39 = vld [vmem:[#allocation2] sm:$0xff]
  %v40 = vld [vmem:[%s0] sm:$0xf]
  %v41 = vunpack.c.l.bf16 %v40
  %v42 = vpack.c.bf16 %v39, %v39
  %v59 = vunpack.c.l.b16 %v23
  %v60 = vunpack.c.l.b16 %v24
  %v61 = vunpack.c.l.b16 %v25
  %v62 = vunpack.c.l.b16 %v26
  %v63 = vunpack.c.l.b16 %v27
  %v64 = vunpack.c.l.b16 %v28
  %v65 = vunpack.c.l.b16 %v29
  %v66 = vunpack.c.l.b16 %v30
  %v67 = vunpack.c.l.b16 %v31
  %v68 = vunpack.c.l.b16 %v32
  %v69 = vunpack.c.l.b16 %v33
  %v70 = vunpack.c.l.b16 %v34
  %v71 = vunpack.c.l.b16 %v35
  %v72 = vunpack.c.l.b16 %v36
  %v73 = vunpack.c.l.b16 %v37
  %v74 = vunpack.c.l.b16 %v38
  %v75 = vpack.c.b16 %v60, %v59
  %v76 = vpack.c.b16 %v62, %v61
  %v77 = vpack.c.b16 %v64, %v63
  %v78 = vpack.c.b16 %v66, %v65
  %v79 = vpack.c.b16 %v68, %v67
  %v80 = vpack.c.b16 %v70, %v69
  %v81 = vpack.c.b16 %v72, %v71
  %v82 = vpack.c.b16 %v74, %v73
  %91 = vmatprep.subr.bf16.mxu0 0
  %92 = vmatpush1.bf16.msra.mxu0 %v82
  %93 = vmatprep.subr.bf16.mxu0 0
  %94 = vmatpush1.bf16.msra.mxu0 %v81
  %95 = vmatprep.subr.bf16.mxu0 0
  %96 = vmatpush1.bf16.msra.mxu0 %v80
  %97 = vmatprep.subr.bf16.mxu0 0
  %98 = vmatpush1.bf16.msra.mxu0 %v79
  %99 = vmatprep.subr.bf16.mxu0 0
  %100 = vmatpush1.bf16.msra.mxu0 %v78
  %101 = vmatprep.subr.bf16.mxu0 0
  %102 = vmatpush1.bf16.msra.mxu0 %v77
  %103 = vmatprep.subr.bf16.mxu0 0
  %104 = vmatpush1.bf16.msra.mxu0 %v76
  %105 = vmatprep.subr.bf16.mxu0 0
  %106 = vmatpush1.bf16.msra.mxu0 %v75
  %107 = vmatprep.subr.bf16.mxu0 0
  %108 = vmatpush2.bf16.msra.mxu0 0
  %109 = vmatprep.subr.bf16.mxu0 0
  %110 = vmatpush2.bf16.msra.mxu0 0
  %111 = vmatprep.subr.bf16.mxu0 0
  %112 = vmatpush2.bf16.msra.mxu0 0
  %113 = vmatprep.subr.bf16.mxu0 0
  %114 = vmatpush2.bf16.msra.mxu0 0
  %115 = vmatprep.subr.bf16.mxu0 0
  %116 = vmatpush2.bf16.msra.mxu0 0
  %117 = vmatprep.subr.bf16.mxu0 0
  %118 = vmatpush2.bf16.msra.mxu0 0
  %119 = vmatprep.subr.bf16.mxu0 0
  %120 = vmatpush2.bf16.msra.mxu0 0
  %121 = vmatprep.subr.bf16.mxu0 0
  %122 = vmatpush2.bf16.msra.mxu0 0
  %123 = vmatprep.mubr.bf16.mxu0 0
  %124 = vmatmul.mubr.bf16.gmra.mxu0 %v42
  %v125 = vpop.f32.mrf.mxu0
  %v126 = vadd.f32 0.0, %v125
  %v127 = vpop.f32.mrf.mxu0
  %v128 = vpop.f32.mrf.mxu0
  %v129 = vpop.f32.mrf.mxu0
  %130 = vdwg.mxu0
  %v131 = vadd.f32 %v41, %v126
  %v132 = vtanh.pop %v131
  %s133 = scalar_lea.vmem %s0, 4
  %v134 = vld [vmem:[%s133] sm:$0xf]
  %v135 = vunpack.c.l.bf16 %v134
  %v136 = vpack.c.bf16 %v132, %v132
  %137 = vmatprep.subr.bf16.mxu0 0
  %138 = vmatpush1.bf16.msra.mxu0 %v82
  %139 = vmatprep.subr.bf16.mxu0 0
  %140 = vmatpush1.bf16.msra.mxu0 %v81
  %141 = vmatprep.subr.bf16.mxu0 0
  %142 = vmatpush1.bf16.msra.mxu0 %v80
  %143 = vmatprep.subr.bf16.mxu0 0
  %144 = vmatpush1.bf16.msra.mxu0 %v79
  %145 = vmatprep.subr.bf16.mxu0 0
  %146 = vmatpush1.bf16.msra.mxu0 %v78
  %147 = vmatprep.subr.bf16.mxu0 0
  %148 = vmatpush1.bf16.msra.mxu0 %v77
  %149 = vmatprep.subr.bf16.mxu0 0
  %150 = vmatpush1.bf16.msra.mxu0 %v76
  %151 = vmatprep.subr.bf16.mxu0 0
  %152 = vmatpush1.bf16.msra.mxu0 %v75
  %153 = vmatprep.subr.bf16.mxu0 0
  %154 = vmatpush2.bf16.msra.mxu0 0
  %155 = vmatprep.subr.bf16.mxu0 0
  %156 = vmatpush2.bf16.msra.mxu0 0
  %157 = vmatprep.subr.bf16.mxu0 0
  %158 = vmatpush2.bf16.msra.mxu0 0
  %159 = vmatprep.subr.bf16.mxu0 0
  %160 = vmatpush2.bf16.msra.mxu0 0
  %161 = vmatprep.subr.bf16.mxu0 0
  %162 = vmatpush2.bf16.msra.mxu0 0
  %163 = vmatprep.subr.bf16.mxu0 0
  %164 = vmatpush2.bf16.msra.mxu0 0
  %165 = vmatprep.subr.bf16.mxu0 0
  %166 = vmatpush2.bf16.msra.mxu0 0
  %167 = vmatprep.subr.bf16.mxu0 0
  %168 = vmatpush2.bf16.msra.mxu0 0
  %169 = vmatprep.mubr.bf16.mxu0 0
  %170 = vmatmul.mubr.bf16.gmra.mxu0 %v136
  %v171 = vpop.f32.mrf.mxu0
  %v172 = vadd.f32 0.0, %v171
  %v173 = vpop.f32.mrf.mxu0
  %v174 = vpop.f32.mrf.mxu0
  %v175 = vpop.f32.mrf.mxu0
  %176 = vdwg.mxu0
  %v177 = vadd.f32 %v135, %v172
  %v178 = vtanh.pop %v177
  %s179 = scalar_lea.vmem %s0, 8
  %v180 = vld [vmem:[%s179] sm:$0xf]
  %v181 = vunpack.c.l.bf16 %v180
  %v182 = vpack.c.bf16 %v178, %v178
  %183 = vmatprep.subr.bf16.mxu0 0
  %184 = vmatpush1.bf16.msra.mxu0 %v82
  %185 = vmatprep.subr.bf16.mxu0 0
  %186 = vmatpush1.bf16.msra.mxu0 %v81
  %187 = vmatprep.subr.bf16.mxu0 0
  %188 = vmatpush1.bf16.msra.mxu0 %v80
  %189 = vmatprep.subr.bf16.mxu0 0
  %190 = vmatpush1.bf16.msra.mxu0 %v79
  %191 = vmatprep.subr.bf16.mxu0 0
  %192 = vmatpush1.bf16.msra.mxu0 %v78
  %193 = vmatprep.subr.bf16.mxu0 0
  %194 = vmatpush1.bf16.msra.mxu0 %v77
  %195 = vmatprep.subr.bf16.mxu0 0
  %196 = vmatpush1.bf16.msra.mxu0 %v76
  %197 = vmatprep.subr.bf16.mxu0 0
  %198 = vmatpush1.bf16.msra.mxu0 %v75
  %199 = vmatprep.subr.bf16.mxu0 0
  %200 = vmatpush2.bf16.msra.mxu0 0
  %201 = vmatprep.subr.bf16.mxu0 0
  %202 = vmatpush2.bf16.msra.mxu0 0
  %203 = vmatprep.subr.bf16.mxu0 0
  %204 = vmatpush2.bf16.msra.mxu0 0
  %205 = vmatprep.subr.bf16.mxu0 0
  %206 = vmatpush2.bf16.msra.mxu0 0
  %207 = vmatprep.subr.bf16.mxu0 0
  %208 = vmatpush2.bf16.msra.mxu0 0
  %209 = vmatprep.subr.bf16.mxu0 0
  %210 = vmatpush2.bf16.msra.mxu0 0
  %211 = vmatprep.subr.bf16.mxu0 0
  %212 = vmatpush2.bf16.msra.mxu0 0
  %213 = vmatprep.subr.bf16.mxu0 0
  %214 = vmatpush2.bf16.msra.mxu0 0
  %215 = vmatprep.mubr.bf16.mxu0 0
  %216 = vmatmul.mubr.bf16.gmra.mxu0 %v182
  %v217 = vpop.f32.mrf.mxu0
  %v218 = vadd.f32 0.0, %v217
  %v219 = vpop.f32.mrf.mxu0
  %v220 = vpop.f32.mrf.mxu0
  %v221 = vpop.f32.mrf.mxu0
  %222 = vdwg.mxu0
  %v223 = vadd.f32 %v181, %v218
  %v224 = vtanh.pop %v223
  %s225 = scalar_lea.vmem %s0, 12
  %v226 = vld [vmem:[%s225] sm:$0xf]
  %v227 = vunpack.c.l.bf16 %v226
  %v228 = vpack.c.bf16 %v224, %v224
  %229 = vmatprep.subr.bf16.mxu0 0
  %230 = vmatpush1.bf16.msra.mxu0 %v82
  %231 = vmatprep.subr.bf16.mxu0 0
  %232 = vmatpush1.bf16.msra.mxu0 %v81
  %233 = vmatprep.subr.bf16.mxu0 0
  %234 = vmatpush1.bf16.msra.mxu0 %v80
  %235 = vmatprep.subr.bf16.mxu0 0
  %236 = vmatpush1.bf16.msra.mxu0 %v79
  %237 = vmatprep.subr.bf16.mxu0 0
  %238 = vmatpush1.bf16.msra.mxu0 %v78
  %239 = vmatprep.subr.bf16.mxu0 0
  %240 = vmatpush1.bf16.msra.mxu0 %v77
  %241 = vmatprep.subr.bf16.mxu0 0
  %242 = vmatpush1.bf16.msra.mxu0 %v76
  %243 = vmatprep.subr.bf16.mxu0 0
  %244 = vmatpush1.bf16.msra.mxu0 %v75
  %245 = vmatprep.subr.bf16.mxu0 0
  %246 = vmatpush2.bf16.msra.mxu0 0
  %247 = vmatprep.subr.bf16.mxu0 0
  %248 = vmatpush2.bf16.msra.mxu0 0
  %249 = vmatprep.subr.bf16.mxu0 0
  %250 = vmatpush2.bf16.msra.mxu0 0
  %251 = vmatprep.subr.bf16.mxu0 0
  %252 = vmatpush2.bf16.msra.mxu0 0
  %253 = vmatprep.subr.bf16.mxu0 0
  %254 = vmatpush2.bf16.msra.mxu0 0
  %255 = vmatprep.subr.bf16.mxu0 0
  %256 = vmatpush2.bf16.msra.mxu0 0
  %257 = vmatprep.subr.bf16.mxu0 0
  %258 = vmatpush2.bf16.msra.mxu0 0
  %259 = vmatprep.subr.bf16.mxu0 0
  %260 = vmatpush2.bf16.msra.mxu0 0
  %261 = vmatprep.mubr.bf16.mxu0 0
  %262 = vmatmul.mubr.bf16.gmra.mxu0 %v228
  %v263 = vpop.f32.mrf.mxu0
  %v264 = vadd.f32 0.0, %v263
  %v265 = vpop.f32.mrf.mxu0
  %v266 = vpop.f32.mrf.mxu0
  %v267 = vpop.f32.mrf.mxu0
  %268 = vdwg.mxu0
  %v269 = vadd.f32 %v227, %v264
  %v270 = vtanh.pop %v269
  %s271 = scalar_lea.vmem %s0, 16
  %v272 = vld [vmem:[%s271] sm:$0xf]
  %v273 = vunpack.c.l.bf16 %v272
  %v274 = vpack.c.bf16 %v270, %v270
  %275 = vmatprep.subr.bf16.mxu0 0
  %276 = vmatpush1.bf16.msra.mxu0 %v82
  %277 = vmatprep.subr.bf16.mxu0 0
  %278 = vmatpush1.bf16.msra.mxu0 %v81
  %279 = vmatprep.subr.bf16.mxu0 0
  %280 = vmatpush1.bf16.msra.mxu0 %v80
  %281 = vmatprep.subr.bf16.mxu0 0
  %282 = vmatpush1.bf16.msra.mxu0 %v79
  %283 = vmatprep.subr.bf16.mxu0 0
  %284 = vmatpush1.bf16.msra.mxu0 %v78
  %285 = vmatprep.subr.bf16.mxu0 0
  %286 = vmatpush1.bf16.msra.mxu0 %v77
  %287 = vmatprep.subr.bf16.mxu0 0
  %288 = vmatpush1.bf16.msra.mxu0 %v76
  %289 = vmatprep.subr.bf16.mxu0 0
  %290 = vmatpush1.bf16.msra.mxu0 %v75
  %291 = vmatprep.subr.bf16.mxu0 0
  %292 = vmatpush2.bf16.msra.mxu0 0
  %293 = vmatprep.subr.bf16.mxu0 0
  %294 = vmatpush2.bf16.msra.mxu0 0
  %295 = vmatprep.subr.bf16.mxu0 0
  %296 = vmatpush2.bf16.msra.mxu0 0
  %297 = vmatprep.subr.bf16.mxu0 0
  %298 = vmatpush2.bf16.msra.mxu0 0
  %299 = vmatprep.subr.bf16.mxu0 0
  %300 = vmatpush2.bf16.msra.mxu0 0
  %301 = vmatprep.subr.bf16.mxu0 0
  %302 = vmatpush2.bf16.msra.mxu0 0
  %303 = vmatprep.subr.bf16.mxu0 0
  %304 = vmatpush2.bf16.msra.mxu0 0
  %305 = vmatprep.subr.bf16.mxu0 0
  %306 = vmatpush2.bf16.msra.mxu0 0
  %307 = vmatprep.mubr.bf16.mxu0 0
  %308 = vmatmul.mubr.bf16.gmra.mxu0 %v274
  %v309 = vpop.f32.mrf.mxu0
  %v310 = vadd.f32 0.0, %v309
  %v311 = vpop.f32.mrf.mxu0
  %v312 = vpop.f32.mrf.mxu0
  %v313 = vpop.f32.mrf.mxu0
  %314 = vdwg.mxu0
  %v315 = vadd.f32 %v273, %v310
  %v316 = vtanh.pop %v315
  %s317 = scalar_lea.vmem %s0, 20
  %v318 = vld [vmem:[%s317] sm:$0xf]
  %v319 = vunpack.c.l.bf16 %v318
  %v320 = vpack.c.bf16 %v316, %v316
  %321 = vmatprep.subr.bf16.mxu0 0
  %322 = vmatpush1.bf16.msra.mxu0 %v82
  %323 = vmatprep.subr.bf16.mxu0 0
  %324 = vmatpush1.bf16.msra.mxu0 %v81
  %325 = vmatprep.subr.bf16.mxu0 0
  %326 = vmatpush1.bf16.msra.mxu0 %v80
  %327 = vmatprep.subr.bf16.mxu0 0
  %328 = vmatpush1.bf16.msra.mxu0 %v79
  %329 = vmatprep.subr.bf16.mxu0 0
  %330 = vmatpush1.bf16.msra.mxu0 %v78
  %331 = vmatprep.subr.bf16.mxu0 0
  %332 = vmatpush1.bf16.msra.mxu0 %v77
  %333 = vmatprep.subr.bf16.mxu0 0
  %334 = vmatpush1.bf16.msra.mxu0 %v76
  %335 = vmatprep.subr.bf16.mxu0 0
  %336 = vmatpush1.bf16.msra.mxu0 %v75
  %337 = vmatprep.subr.bf16.mxu0 0
  %338 = vmatpush2.bf16.msra.mxu0 0
  %339 = vmatprep.subr.bf16.mxu0 0
  %340 = vmatpush2.bf16.msra.mxu0 0
  %341 = vmatprep.subr.bf16.mxu0 0
  %342 = vmatpush2.bf16.msra.mxu0 0
  %343 = vmatprep.subr.bf16.mxu0 0
  %344 = vmatpush2.bf16.msra.mxu0 0
  %345 = vmatprep.subr.bf16.mxu0 0
  %346 = vmatpush2.bf16.msra.mxu0 0
  %347 = vmatprep.subr.bf16.mxu0 0
  %348 = vmatpush2.bf16.msra.mxu0 0
  %349 = vmatprep.subr.bf16.mxu0 0
  %350 = vmatpush2.bf16.msra.mxu0 0
  %351 = vmatprep.subr.bf16.mxu0 0
  %352 = vmatpush2.bf16.msra.mxu0 0
  %353 = vmatprep.mubr.bf16.mxu0 0
  %354 = vmatmul.mubr.bf16.gmra.mxu0 %v320
  %v355 = vpop.f32.mrf.mxu0
  %v356 = vadd.f32 0.0, %v355
  %v357 = vpop.f32.mrf.mxu0
  %v358 = vpop.f32.mrf.mxu0
  %v359 = vpop.f32.mrf.mxu0
  %360 = vdwg.mxu0
  %v361 = vadd.f32 %v319, %v356
  %v362 = vtanh.pop %v361
  %s363 = scalar_lea.vmem %s0, 24
  %v364 = vld [vmem:[%s363] sm:$0xf]
  %v365 = vunpack.c.l.bf16 %v364
  %v366 = vpack.c.bf16 %v362, %v362
  %367 = vmatprep.subr.bf16.mxu0 0
  %368 = vmatpush1.bf16.msra.mxu0 %v82
  %369 = vmatprep.subr.bf16.mxu0 0
  %370 = vmatpush1.bf16.msra.mxu0 %v81
  %371 = vmatprep.subr.bf16.mxu0 0
  %372 = vmatpush1.bf16.msra.mxu0 %v80
  %373 = vmatprep.subr.bf16.mxu0 0
  %374 = vmatpush1.bf16.msra.mxu0 %v79
  %375 = vmatprep.subr.bf16.mxu0 0
  %376 = vmatpush1.bf16.msra.mxu0 %v78
  %377 = vmatprep.subr.bf16.mxu0 0
  %378 = vmatpush1.bf16.msra.mxu0 %v77
  %379 = vmatprep.subr.bf16.mxu0 0
  %380 = vmatpush1.bf16.msra.mxu0 %v76
  %381 = vmatprep.subr.bf16.mxu0 0
  %382 = vmatpush1.bf16.msra.mxu0 %v75
  %383 = vmatprep.subr.bf16.mxu0 0
  %384 = vmatpush2.bf16.msra.mxu0 0
  %385 = vmatprep.subr.bf16.mxu0 0
  %386 = vmatpush2.bf16.msra.mxu0 0
  %387 = vmatprep.subr.bf16.mxu0 0
  %388 = vmatpush2.bf16.msra.mxu0 0
  %389 = vmatprep.subr.bf16.mxu0 0
  %390 = vmatpush2.bf16.msra.mxu0 0
  %391 = vmatprep.subr.bf16.mxu0 0
  %392 = vmatpush2.bf16.msra.mxu0 0
  %393 = vmatprep.subr.bf16.mxu0 0
  %394 = vmatpush2.bf16.msra.mxu0 0
  %395 = vmatprep.subr.bf16.mxu0 0
  %396 = vmatpush2.bf16.msra.mxu0 0
  %397 = vmatprep.subr.bf16.mxu0 0
  %398 = vmatpush2.bf16.msra.mxu0 0
  %399 = vmatprep.mubr.bf16.mxu0 0
  %400 = vmatmul.mubr.bf16.gmra.mxu0 %v366
  %v401 = vpop.f32.mrf.mxu0
  %v402 = vadd.f32 0.0, %v401
  %v403 = vpop.f32.mrf.mxu0
  %v404 = vpop.f32.mrf.mxu0
  %v405 = vpop.f32.mrf.mxu0
  %406 = vdwg.mxu0
  %v407 = vadd.f32 %v365, %v402
  %v408 = vtanh.pop %v407
  %s409 = scalar_lea.vmem %s0, 28
  %v410 = vld [vmem:[%s409] sm:$0xf]
  %v411 = vunpack.c.l.bf16 %v410
  %v412 = vpack.c.bf16 %v408, %v408
  %413 = vmatprep.subr.bf16.mxu0 0
  %414 = vmatpush1.bf16.msra.mxu0 %v82
  %415 = vmatprep.subr.bf16.mxu0 0
  %416 = vmatpush1.bf16.msra.mxu0 %v81
  %417 = vmatprep.subr.bf16.mxu0 0
  %418 = vmatpush1.bf16.msra.mxu0 %v80
  %419 = vmatprep.subr.bf16.mxu0 0
  %420 = vmatpush1.bf16.msra.mxu0 %v79
  %421 = vmatprep.subr.bf16.mxu0 0
  %422 = vmatpush1.bf16.msra.mxu0 %v78
  %423 = vmatprep.subr.bf16.mxu0 0
  %424 = vmatpush1.bf16.msra.mxu0 %v77
  %425 = vmatprep.subr.bf16.mxu0 0
  %426 = vmatpush1.bf16.msra.mxu0 %v76
  %427 = vmatprep.subr.bf16.mxu0 0
  %428 = vmatpush1.bf16.msra.mxu0 %v75
  %429 = vmatprep.subr.bf16.mxu0 0
  %430 = vmatpush2.bf16.msra.mxu0 0
  %431 = vmatprep.subr.bf16.mxu0 0
  %432 = vmatpush2.bf16.msra.mxu0 0
  %433 = vmatprep.subr.bf16.mxu0 0
  %434 = vmatpush2.bf16.msra.mxu0 0
  %435 = vmatprep.subr.bf16.mxu0 0
  %436 = vmatpush2.bf16.msra.mxu0 0
  %437 = vmatprep.subr.bf16.mxu0 0
  %438 = vmatpush2.bf16.msra.mxu0 0
  %439 = vmatprep.subr.bf16.mxu0 0
  %440 = vmatpush2.bf16.msra.mxu0 0
  %441 = vmatprep.subr.bf16.mxu0 0
  %442 = vmatpush2.bf16.msra.mxu0 0
  %443 = vmatprep.subr.bf16.mxu0 0
  %444 = vmatpush2.bf16.msra.mxu0 0
  %445 = vmatprep.mubr.bf16.mxu0 0
  %446 = vmatmul.mubr.bf16.gmra.mxu0 %v412
  %v447 = vpop.f32.mrf.mxu0
  %v448 = vadd.f32 0.0, %v447
  %v449 = vpop.f32.mrf.mxu0
  %v450 = vpop.f32.mrf.mxu0
  %v451 = vpop.f32.mrf.mxu0
  %452 = vdwg.mxu0
  %v453 = vadd.f32 %v411, %v448
  %v454 = vtanh.pop %v453
  %455 = vst [vmem:[#allocation2] sm:$0xff] %v454
  // Predicated region
  $region22: #{simple_rnn_forward.5} parent=0 // pred_check
    %p456 = pneg %p18
  $region23: #{simple_rnn_forward.5} parent=0 // pred_check_branch
    %458 = sbr.rel (%p456) target = $region25
  $region24: #{simple_rnn_forward.5} parent=0 // pred_region
    %v459 = vpack.c.bf16 %v454, %v454
    %v460 = vld [vmem:[%s2] sm:$0xf]
    %v461 = vld [vmem:[%s2 + $0x4] sm:$0xf]
    %v462 = vld [vmem:[%s2 + $0x8] sm:$0xf]
    %v463 = vld [vmem:[%s2 + $0xc] sm:$0xf]
    %v464 = vld [vmem:[%s2 + $0x10] sm:$0xf]
    %v465 = vld [vmem:[%s2 + $0x14] sm:$0xf]
    %v466 = vld [vmem:[%s2 + $0x18] sm:$0xf]
    %v467 = vld [vmem:[%s2 + $0x1c] sm:$0xf]
    %v468 = vld [vmem:[%s2 + $0x20] sm:$0xf]
    %v469 = vld [vmem:[%s2 + $0x24] sm:$0xf]
    %v470 = vld [vmem:[%s2 + $0x28] sm:$0xf]
    %v471 = vld [vmem:[%s2 + $0x2c] sm:$0xf]
    %v472 = vld [vmem:[%s2 + $0x30] sm:$0xf]
    %v473 = vld [vmem:[%s2 + $0x34] sm:$0xf]
    %v474 = vld [vmem:[%s2 + $0x38] sm:$0xf]
    %v475 = vld [vmem:[%s2 + $0x3c] sm:$0xf]
    %v476 = vld [vmem:[%s3] sm:$0x1]
    %v478 = vlaneseq
    %v479 = vshrl.u32 %v478, 7
    %v480 = vsub.s32 0, %v479
    %v481 = vrot.slane %v476, %v480
    %v499 = vunpack.c.l.b16 %v460
    %v500 = vunpack.c.l.b16 %v461
    %v501 = vunpack.c.l.b16 %v462
    %v502 = vunpack.c.l.b16 %v463
    %v503 = vunpack.c.l.b16 %v464
    %v504 = vunpack.c.l.b16 %v465
    %v505 = vunpack.c.l.b16 %v466
    %v506 = vunpack.c.l.b16 %v467
    %v507 = vunpack.c.l.b16 %v468
    %v508 = vunpack.c.l.b16 %v469
    %v509 = vunpack.c.l.b16 %v470
    %v510 = vunpack.c.l.b16 %v471
    %v511 = vunpack.c.l.b16 %v472
    %v512 = vunpack.c.l.b16 %v473
    %v513 = vunpack.c.l.b16 %v474
    %v514 = vunpack.c.l.b16 %v475
    %v515 = vpack.c.b16 %v500, %v499
    %v516 = vpack.c.b16 %v502, %v501
    %v517 = vpack.c.b16 %v504, %v503
    %v518 = vpack.c.b16 %v506, %v505
    %v519 = vpack.c.b16 %v508, %v507
    %v520 = vpack.c.b16 %v510, %v509
    %v521 = vpack.c.b16 %v512, %v511
    %v522 = vpack.c.b16 %v514, %v513
    %531 = vmatprep.subr.bf16.mxu0 0
    %532 = vmatpush1.bf16.msra.mxu0 %v522
    %533 = vmatprep.subr.bf16.mxu0 0
    %534 = vmatpush1.bf16.msra.mxu0 %v521
    %535 = vmatprep.subr.bf16.mxu0 0
    %536 = vmatpush1.bf16.msra.mxu0 %v520
    %537 = vmatprep.subr.bf16.mxu0 0
    %538 = vmatpush1.bf16.msra.mxu0 %v519
    %539 = vmatprep.subr.bf16.mxu0 0
    %540 = vmatpush1.bf16.msra.mxu0 %v518
    %541 = vmatprep.subr.bf16.mxu0 0
    %542 = vmatpush1.bf16.msra.mxu0 %v517
    %543 = vmatprep.subr.bf16.mxu0 0
    %544 = vmatpush1.bf16.msra.mxu0 %v516
    %545 = vmatprep.subr.bf16.mxu0 0
    %546 = vmatpush1.bf16.msra.mxu0 %v515
    %547 = vmatprep.subr.bf16.mxu0 0
    %548 = vmatpush2.bf16.msra.mxu0 0
    %549 = vmatprep.subr.bf16.mxu0 0
    %550 = vmatpush2.bf16.msra.mxu0 0
    %551 = vmatprep.subr.bf16.mxu0 0
    %552 = vmatpush2.bf16.msra.mxu0 0
    %553 = vmatprep.subr.bf16.mxu0 0
    %554 = vmatpush2.bf16.msra.mxu0 0
    %555 = vmatprep.subr.bf16.mxu0 0
    %556 = vmatpush2.bf16.msra.mxu0 0
    %557 = vmatprep.subr.bf16.mxu0 0
    %558 = vmatpush2.bf16.msra.mxu0 0
    %559 = vmatprep.subr.bf16.mxu0 0
    %560 = vmatpush2.bf16.msra.mxu0 0
    %561 = vmatprep.subr.bf16.mxu0 0
    %562 = vmatpush2.bf16.msra.mxu0 0
    %563 = vmatprep.mubr.bf16.mxu0 0
    %564 = vmatmul.mubr.bf16.gmra.mxu0 %v459
    %v565 = vpop.f32.mrf.mxu0
    %v566 = vadd.f32 %v481, %v565
    %v567 = vpop.f32.mrf.mxu0
    %v568 = vpop.f32.mrf.mxu0
    %v569 = vpop.f32.mrf.mxu0
    %570 = vdwg.mxu0
    %571 = vst [vmem:[%s4] sm:$0xff] %v566
  $region25: #{simple_rnn_forward.5} parent=0 // pred_fallthru
    _
  // Predicated region
  $region26: #{simple_rnn_forward.5} parent=0 // pred_check
    _
  $region27: #{simple_rnn_forward.5} parent=0 // pred_check_branch
    %573 = sbr.rel (0) target = $region29
  $region28: #{simple_rnn_forward.5} parent=0 // pred_region
    _
  $region29: #{simple_rnn_forward.5} parent=0 // pred_fallthru
    _
  // Predicated region
  $region30: #{simple_rnn_forward.5} parent=0 // pred_check
    _
  $region31: #{simple_rnn_forward.5} parent=0 // pred_check_branch
    %575 = sbr.rel (0) target = $region33
  $region32: #{simple_rnn_forward.5} parent=0 // pred_region
    _
  $region33: #{simple_rnn_forward.5} parent=0 // pred_fallthru
    _

</llo_original>
